<compile_context>
chip_gen: v6e
topology: v6e:2x2x1
jax: 0.10.0
libtpu: 0.0.40
codegen_flags: <defaults>
</compile_context>

<pallas_src>
import jax
import jax.numpy as jnp
from jax.experimental import pallas as pl
from jax.experimental.pallas import tpu as pltpu


def _vmem_limit_bytes():
    try:
        cap = getattr(pltpu.get_tpu_info(), "vmem_capacity_bytes", None)
        if cap:
            return int(min(cap * 3 // 4, 100 * 1024 * 1024))
    except Exception:
        pass
    return 48 * 1024 * 1024


_VMEM_LIMIT = _vmem_limit_bytes()


# ----------------------------------------------------------------------------
# Encoder fusion kernel: fc_1/fc_2 + ReLU, SE channel attention, hoisted
# enc @ W_enc_att and the fused init_h|init_c projection. grid=(B,), parallel.
# ----------------------------------------------------------------------------
def _encode_kernel(vis_ref, ir_ref, w1_ref, b1_ref, w2_ref, b2_ref,
                   wse1_ref, bse1_ref, wse2_ref, bse2_ref,
                   wea_ref, bea_ref, whc_ref, bhc_ref,
                   enc_ref, att_ref, hc_ref):
    v = jnp.maximum(
        jnp.dot(vis_ref[...], w1_ref[...], preferred_element_type=jnp.float32)
        + b1_ref[...], 0.0)                           # relu(fc_1(visual))
    r = jnp.maximum(
        jnp.dot(ir_ref[...], w2_ref[...], preferred_element_type=jnp.float32)
        + b2_ref[...], 0.0)                           # relu(fc_2(ir))
    x = jnp.concatenate([v, r], axis=-1)              # (N, E = 2*d_model)

    # channel attention (squeeze-excite with `reduction`)
    pooled = jnp.mean(x, axis=0, keepdims=True)       # (1, E)
    hid = jnp.maximum(
        jnp.dot(pooled, wse1_ref[...], preferred_element_type=jnp.float32)
        + bse1_ref[...], 0.0)
    gate = jax.nn.sigmoid(
        jnp.dot(hid, wse2_ref[...], preferred_element_type=jnp.float32)
        + bse2_ref[...])
    enc = x * gate                                    # (N, E)

    enc_ref[...] = enc.astype(enc_ref.dtype)
    # Time-invariant encoder-side attention projection (hoisted).
    att_ref[...] = (jnp.dot(enc, wea_ref[...], preferred_element_type=jnp.float32)
                    + bea_ref[...]).astype(att_ref.dtype)
    # init_hidden_state fused here: [h0 | c0] = mean(enc) @ W_hc + b_hc
    mean = jnp.mean(enc, axis=0, keepdims=True)       # (1, E)
    hc_ref[...] = (jnp.dot(mean, whc_ref[...], preferred_element_type=jnp.float32)
                   + bhc_ref[...]).astype(hc_ref.dtype)


def encode(vis_tok, ir_tok, params):
    """vis/ir tokens (B,N,Cin) -> enc (B,N,E), att_enc (B,N,A), h0c0 (B,2D)."""
    B, N, Cin = vis_tok.shape
    d = params["fc1_w"].shape[1]
    E = 2 * d
    Hse = params["se1_w"].shape[1]
    A = params["wea"].shape[1]
    D2 = params["w_init_hc"].shape[1]

    enc, att_enc, hc = pl.pallas_call(
        _encode_kernel,
        out_shape=(
            jax.ShapeDtypeStruct((B, N, E), jnp.float32),
            jax.ShapeDtypeStruct((B, N, A), jnp.float32),
            jax.ShapeDtypeStruct((B, 1, D2), jnp.float32),
        ),
        grid=(B,),
        in_specs=[
            pl.BlockSpec((None, N, Cin), lambda b: (b, 0, 0)),
            pl.BlockSpec((None, N, Cin), lambda b: (b, 0, 0)),
            pl.BlockSpec((Cin, d), lambda b: (0, 0)),
            pl.BlockSpec((1, d), lambda b: (0, 0)),
            pl.BlockSpec((Cin, d), lambda b: (0, 0)),
            pl.BlockSpec((1, d), lambda b: (0, 0)),
            pl.BlockSpec((E, Hse), lambda b: (0, 0)),
            pl.BlockSpec((1, Hse), lambda b: (0, 0)),
            pl.BlockSpec((Hse, E), lambda b: (0, 0)),
            pl.BlockSpec((1, E), lambda b: (0, 0)),
            pl.BlockSpec((E, A), lambda b: (0, 0)),
            pl.BlockSpec((1, A), lambda b: (0, 0)),
            pl.BlockSpec((E, D2), lambda b: (0, 0)),
            pl.BlockSpec((1, D2), lambda b: (0, 0)),
        ],
        out_specs=(
            pl.BlockSpec((None, N, E), lambda b: (b, 0, 0)),
            pl.BlockSpec((None, N, A), lambda b: (b, 0, 0)),
            pl.BlockSpec((None, 1, D2), lambda b: (b, 0, 0)),
        ),
        compiler_params=pltpu.CompilerParams(
            dimension_semantics=("parallel",),
            vmem_limit_bytes=_VMEM_LIMIT),
    )(vis_tok, ir_tok,
      params["fc1_w"], params["fc1_b"].reshape(1, -1),
      params["fc2_w"], params["fc2_b"].reshape(1, -1),
      params["se1_w"], params["se1_b"].reshape(1, -1),
      params["se2_w"], params["se2_b"].reshape(1, -1),
      params["wea"], params["bea"].reshape(1, -1),
      params["w_init_hc"], params["b_init_hc"].reshape(1, -1))
    return enc, att_enc, hc.reshape(B, D2)


# ----------------------------------------------------------------------------
# Hoisted pre-pass: attention + AoA + input half of the LSTM gates for a whole
# time tile of one image per grid step.  grid=(B, T//tt), fully parallel.
# ----------------------------------------------------------------------------
def _prepass_kernel(emb_ref, enc_ref, attv_ref, wemb_ref, bemb_ref,
                    wfull_ref, wctx_ref, waoa_ref, pg_ref):
    A = attv_ref.shape[-1]
    emb = emb_ref[...]                                            # (TT, De)

    # One fused matmul for all embedding-side projections:
    # [att_dec | info_emb+bi | gate_emb+bg | gates_emb+bih]
    proj = (jnp.dot(emb, wemb_ref[...], preferred_element_type=jnp.float32)
            + bemb_ref[...])                                      # (TT, 3A+4D)
    att_dec = proj[:, 0 * A:1 * A]
    info_e = proj[:, 1 * A:2 * A]
    gate_e = proj[:, 2 * A:3 * A]
    gates_e = proj[:, 3 * A:]

    # soft attention over pixels (full_att bias dropped: softmax shift-invariant)
    att_enc = attv_ref[...]                                       # (N, A)
    scores = jnp.maximum(att_enc[None, :, :] + att_dec[:, None, :], 0.0)
    e = jnp.sum(scores * wfull_ref[...][None, :, :], axis=-1)     # (TT, N)
    e = e - jnp.max(e, axis=-1, keepdims=True)
    p = jnp.exp(e)
    alpha = p * pl.reciprocal(jnp.sum(p, axis=-1, keepdims=True), approx=True)

    # context: one (TT, N) @ (N, E) MXU matmul per (image, time-tile)
    context = jnp.dot(alpha, enc_ref[...], preferred_element_type=jnp.float32)

    # AoA gating, context-side projections fused into one (E, 2A) matmul
    cproj = jnp.dot(context, wctx_ref[...], preferred_element_type=jnp.float32)
    info = cproj[:, :A] + info_e
    gate = jax.nn.sigmoid(cproj[:, A:] + gate_e)
    aoa = info * gate                                             # (TT, A)

    # input half of the LSTM gates (h @ W_hh + b_hh added in the decode loop)
    pg_ref[...] = (gates_e
                   + jnp.dot(aoa, waoa_ref[...],
                             preferred_element_type=jnp.float32)
                   ).astype(pg_ref.dtype)


def precompute_gates(enc, att_enc, emb_bt, fused, tt):
    B, N, E = enc.shape
    _, T, De = emb_bt.shape
    A = att_enc.shape[-1]
    G = fused["wih_aoa"].shape[-1]                                # 4*D
    wemb, bemb = fused["w_emb_all"], fused["b_emb_all"]
    wfull, wctx, waoa = fused["wfull"], fused["w_ctx_all"], fused["wih_aoa"]

    return pl.pallas_call(
        _prepass_kernel,
        out_shape=jax.ShapeDtypeStruct((B, T, G), jnp.float32),
        grid=(B, T // tt),
        in_specs=[
            pl.BlockSpec((None, tt, De), lambda b, t: (b, t, 0)),   # emb tile
            pl.BlockSpec((None, N, E), lambda b, t: (b, 0, 0)),     # enc[b]
            pl.BlockSpec((None, N, A), lambda b, t: (b, 0, 0)),     # att_enc[b]
            pl.BlockSpec(wemb.shape, lambda b, t: (0, 0)),
            pl.BlockSpec(bemb.shape, lambda b, t: (0, 0)),
            pl.BlockSpec(wfull.shape, lambda b, t: (0, 0)),
            pl.BlockSpec(wctx.shape, lambda b, t: (0, 0)),
            pl.BlockSpec(waoa.shape, lambda b, t: (0, 0)),
        ],
        out_specs=pl.BlockSpec((None, tt, G), lambda b, t: (b, t, 0)),
        compiler_params=pltpu.CompilerParams(
            dimension_semantics=("parallel", "parallel"),
            vmem_limit_bytes=_VMEM_LIMIT),
    )(emb_bt, enc, att_enc, wemb, bemb, wfull, wctx, waoa)


# ----------------------------------------------------------------------------
# Decode loop: grid=(T,), h/c carried in VMEM scratch.  Only the recurrent
# matmul (h @ W_hh), the nonlinearities and the masked state carry remain.
# ----------------------------------------------------------------------------
def _decode_kernel(pg_ref, valid_ref, h0_ref, c0_ref, whh_ref, bhh_ref,
                   h_out_ref, h_s, c_s):
    t = pl.program_id(0)

    @pl.when(t == 0)
    def _():
        h_s[...] = h0_ref[...]
        c_s[...] = c0_ref[...]

    h = h_s[...]
    c = c_s[...]
    D = h.shape[-1]

    gates = (pg_ref[...]
             + jnp.dot(h, whh_ref[...], preferred_element_type=jnp.float32)
             + bhh_ref[...])
    # PyTorch LSTMCell gate order (i, f, g, o)
    i_g = jax.nn.sigmoid(gates[:, 0 * D:1 * D])
    f_g = jax.nn.sigmoid(gates[:, 1 * D:2 * D])
    g_g = jnp.tanh(gates[:, 2 * D:3 * D])
    o_g = jax.nn.sigmoid(gates[:, 3 * D:4 * D])
    c_new = f_g * c + i_g * g_g
    h_new = o_g * jnp.tanh(c_new)

    # rows past their caption length keep their previous state (PyTorch slices
    # them out of the batch; the live rows match exactly).
    live = valid_ref[...] > t                       # (B, 1) from resident int32
    h_upd = jnp.where(live, h_new, h)
    c_upd = jnp.where(live, c_new, c)
    h_s[...] = h_upd
    c_s[...] = c_upd
    h_out_ref[...] = h_upd.astype(h_out_ref.dtype)


def run_decoder(pre_gates_tb, valid_b1, h0, c0, whh, bhh):
    T, B, G = pre_gates_tb.shape
    D = whh.shape[0]
    return pl.pallas_call(
        _decode_kernel,
        out_shape=jax.ShapeDtypeStruct((T, B, D), jnp.float32),
        grid=(T,),
        in_specs=[
            pl.BlockSpec((None, B, G), lambda t: (t, 0, 0)),   # pre_gates[t]
            pl.BlockSpec((B, 1), lambda t: (0, 0)),            # valid_len (resident)
            pl.BlockSpec((B, D), lambda t: (0, 0)),            # h0
            pl.BlockSpec((B, D), lambda t: (0, 0)),            # c0
            pl.BlockSpec((D, 4 * D), lambda t: (0, 0)),        # W_hh
            pl.BlockSpec((1, 4 * D), lambda t: (0, 0)),        # b_hh
        ],
        out_specs=pl.BlockSpec((None, B, D), lambda t: (t, 0, 0)),
        scratch_shapes=[pltpu.VMEM((B, D), jnp.float32),       # h carry
                        pltpu.VMEM((B, D), jnp.float32)],      # c carry
        compiler_params=pltpu.CompilerParams(
            dimension_semantics=("arbitrary",),                # time recurrence
            vmem_limit_bytes=_VMEM_LIMIT),
    )(pre_gates_tb, valid_b1, h0, c0, whh, bhh.reshape(1, -1))


# ----------------------------------------------------------------------------
# Tiled vocab head over all (T*B) hidden states (dropout == identity, eval).
# ----------------------------------------------------------------------------
def _vocab_head_kernel(h_ref, mask_ref, w_ref, b_ref, o_ref):
    preds = (jnp.dot(h_ref[...], w_ref[...], preferred_element_type=jnp.float32)
             + b_ref[...])
    # rows past valid_len must stay exactly zero (matches torch.zeros init)
    o_ref[...] = (preds * mask_ref[...]).astype(o_ref.dtype)


def vocab_head(h_flat, mask_flat, wfc, bfc):
    M, D = h_flat.shape
    V = wfc.shape[1]
    TM = min(M, 256)          # M is a multiple of 8 (T bucketed), so TM is too
    TV = min(V, 2048)         # lane-dense, multiple of 128 (or full V)
    return pl.pallas_call(
        _vocab_head_kernel,
        out_shape=jax.ShapeDtypeStruct((M, V), jnp.float32),
        grid=(pl.cdiv(M, TM), pl.cdiv(V, TV)),
        in_specs=[pl.BlockSpec((TM, D), lambda i, j: (i, 0)),
                  pl.BlockSpec((TM, 1), lambda i, j: (i, 0)),
                  pl.BlockSpec((D, TV), lambda i, j: (0, j)),
                  pl.BlockSpec((1, TV), lambda i, j: (0, j))],
        out_specs=pl.BlockSpec((TM, TV), lambda i, j: (i, j)),
        compiler_params=pltpu.CompilerParams(
            dimension_semantics=("parallel", "parallel"),
            vmem_limit_bytes=_VMEM_LIMIT),
    )(h_flat, mask_flat, wfc, bfc.reshape(1, -1))


# ----------------------------------------------------------------------------
# Full Decoder.forward
# ----------------------------------------------------------------------------
def decoder_forward(params, visual, ir, encoded_captions, valid_len):
    """visual/ir: NCHW (B, Cin, H, W); encoded_captions: (B, T_cap) int32."""
    B, Cin = visual.shape[0], visual.shape[1]
    # PyTorch: x.transpose(1, 3) -> (B, W, H, C); flatten pixels W-major.
    vis_tok = jnp.transpose(visual, (0, 3, 2, 1)).reshape(B, -1, Cin)
    ir_tok = jnp.transpose(ir, (0, 3, 2, 1)).reshape(B, -1, Cin)

    enc, att_enc, h0c0 = encode(vis_tok, ir_tok, params)          # h0c0 (B, 2D)
    D = params["whh"].shape[0]
    h0, c0 = h0c0[:, :D], h0c0[:, D:]

    # Bucket T to a multiple of 8 (fewer recompiles; even time tiles).
    T_raw = int(max(valid_len))
    T = ((T_raw + 7) // 8) * 8

    emb = params["embedding"][encoded_captions]                   # (B,T_cap,De) gather (XLA glue)
    T_cap = emb.shape[1]
    emb_bt = emb[:, :T, :] if T <= T_cap else jnp.pad(
        emb, ((0, 0), (0, T - T_cap), (0, 0)))

    # Fused weights for the hoisted pre-pass (tiny one-time XLA concatenations).
    fused = dict(
        w_emb_all=jnp.concatenate([params["wda"], params["wi_emb"],
                                   params["wg_emb"], params["wih_emb"]], axis=1),
        b_emb_all=jnp.concatenate([params["bda"], params["bi"], params["bg"],
                                   params["bih"]]).reshape(1, -1),
        wfull=params["wfull"].reshape(1, -1),
        w_ctx_all=jnp.concatenate([params["wi_ctx"], params["wg_ctx"]], axis=1),
        wih_aoa=params["wih_aoa"],
    )

    # Largest power-of-two time tile that divides the bucketed T.
    tt = next(c for c in (64, 32, 16, 8) if T % c == 0)

    pre_gates_bt = precompute_gates(enc, att_enc, emb_bt, fused, tt)  # (B,T,4D)
    pre_gates_tb = jnp.transpose(pre_gates_bt, (1, 0, 2))             # (T,B,4D)

    valid = jnp.asarray(valid_len, jnp.int32)
    h_all = run_decoder(pre_gates_tb, valid.reshape(B, 1), h0, c0,
                        params["whh"], params["bhh"])                 # (T, B, D)

    t_idx = jnp.arange(T, dtype=jnp.int32)
    mask_flat = (t_idx[:, None] < valid[None, :]).astype(jnp.float32)
    mask_flat = mask_flat.reshape(T * B, 1)

    V = params["wfc"].shape[1]
    preds_flat = vocab_head(h_all.reshape(T * B, D), mask_flat,
                            params["wfc"], params["bfc"])             # (T*B, V)
    preds = preds_flat.reshape(T, B, V).transpose(1, 0, 2)            # (B, T, V)
    return preds[:, :T_raw, :]


# ----------------------------------------------------------------------------
# Deterministic parameter initialization (mirrors __init__ shapes, scaled down;
# concat/cat weights pre-split and init_h/init_c pre-fused).
# ----------------------------------------------------------------------------
def init_params(key, *, cin, d_model, reduction, embed_dim, decoder_dim,
                vocab_size, attention_dim):
    E = 2 * d_model
    Hse = max(E // reduction, 1)
    D = decoder_dim
    ks = jax.random.split(key, 26)
    u = lambda k, shape, s=0.1: jax.random.uniform(k, shape, jnp.float32, -s, s)
    return dict(
        embedding=u(ks[0], (vocab_size, embed_dim)),
        fc1_w=u(ks[1], (cin, d_model)), fc1_b=jnp.zeros((d_model,), jnp.float32),
        fc2_w=u(ks[2], (cin, d_model)), fc2_b=jnp.zeros((d_model,), jnp.float32),
        se1_w=u(ks[3], (E, Hse)), se1_b=u(ks[4], (Hse,)),
        se2_w=u(ks[5], (Hse, E)), se2_b=u(ks[6], (E,)),
        # init_h / init_c fused into one (E, 2D) projection
        w_init_hc=u(ks[7], (E, 2 * D)), b_init_hc=u(ks[8], (2 * D,)),
        # attention
        wea=u(ks[9], (E, attention_dim)), bea=u(ks[10], (attention_dim,)),
        wda=u(ks[11], (embed_dim, attention_dim)), bda=u(ks[12], (attention_dim,)),
        wfull=u(ks[13], (attention_dim,)),
        # AoA gating, weights pre-split (context part / embedding part)
        wi_ctx=u(ks[14], (E, attention_dim)),
        wi_emb=u(ks[15], (embed_dim, attention_dim)),
        bi=u(ks[16], (attention_dim,)),
        wg_ctx=u(ks[17], (E, attention_dim)),
        wg_emb=u(ks[18], (embed_dim, attention_dim)),
        bg=u(ks[19], (attention_dim,)),
        # LSTMCell input weight pre-split (embedding part / AoA part)
        wih_emb=u(ks[20], (embed_dim, 4 * D)),
        wih_aoa=u(ks[21], (attention_dim, 4 * D)),
        bih=jnp.zeros((4 * D,), jnp.float32),
        whh=u(ks[22], (D, 4 * D)), bhh=jnp.zeros((4 * D,), jnp.float32),
        wfc=u(ks[23], (D, vocab_size)), bfc=jnp.zeros((vocab_size,), jnp.float32),
    )


if __name__ == "__main__":
    key = jax.random.PRNGKey(0)
    # Small, hardware-friendly stand-ins for (B, 2048, 14, 14):
    # lane dims multiples of 128, token count multiple of 8.
    B, Cin, Hh, Ww = 2, 128, 4, 4
    d_model, reduction = 64, 4            # encoder_dim E = 2*d_model = 128
    embed_dim = decoder_dim = attention_dim = 128
    vocab_size = 256
    T_cap = 8
    valid_len = [8, 5]                    # sorted descending, as in the dataloader

    k1, k2, k3, kp = jax.random.split(key, 4)
    visual = jax.random.normal(k1, (B, Cin, Hh, Ww), jnp.float32)
    ir = jax.random.normal(k2, (B, Cin, Hh, Ww), jnp.float32)
    encoded_captions = jax.random.randint(k3, (B, T_cap), 0, vocab_size)

    params = init_params(kp, cin=Cin, d_model=d_model, reduction=reduction,
                         embed_dim=embed_dim, decoder_dim=decoder_dim,
                         vocab_size=vocab_size, attention_dim=attention_dim)

    preds = decoder_forward(params, visual, ir, encoded_captions, valid_len)
    jax.block_until_ready(preds)
    assert preds.shape == (B, max(valid_len), vocab_size)
    assert bool(jnp.all(jnp.isfinite(preds)))
    # rows past valid_len must be exactly zero (torch.zeros semantics)
    assert float(jnp.max(jnp.abs(preds[1, valid_len[1]:, :]))) == 0.0
    print("KERNEL_OK")
</pallas_src>

<mosaic_0001>
module attributes {stable_mosaic.version = 11 : i64} {
  func.func @_encode_kernel(%arg0: i32, %arg1: memref<1x16x128xf32, #tpu.memory_space<vmem>>, %arg2: memref<1x16x128xf32, #tpu.memory_space<vmem>>, %arg3: memref<128x64xf32, #tpu.memory_space<vmem>>, %arg4: memref<1x64xf32, #tpu.memory_space<vmem>>, %arg5: memref<128x64xf32, #tpu.memory_space<vmem>>, %arg6: memref<1x64xf32, #tpu.memory_space<vmem>>, %arg7: memref<128x32xf32, #tpu.memory_space<vmem>>, %arg8: memref<1x32xf32, #tpu.memory_space<vmem>>, %arg9: memref<32x128xf32, #tpu.memory_space<vmem>>, %arg10: memref<1x128xf32, #tpu.memory_space<vmem>>, %arg11: memref<128x128xf32, #tpu.memory_space<vmem>>, %arg12: memref<1x128xf32, #tpu.memory_space<vmem>>, %arg13: memref<128x256xf32, #tpu.memory_space<vmem>>, %arg14: memref<1x256xf32, #tpu.memory_space<vmem>>, %arg15: memref<1x16x128xf32, #tpu.memory_space<vmem>>, %arg16: memref<1x16x128xf32, #tpu.memory_space<vmem>>, %arg17: memref<1x1x256xf32, #tpu.memory_space<vmem>>) attributes {dimension_semantics = [#tpu.dimension_semantics<parallel>], iteration_bounds = array<i64: 2>, scalar_prefetch = 0 : i64, scratch_operands = 0 : i64, tpu.core_type = #tpu.core_type<tc>, window_params = [{transform_indices = @transform_0, window_bounds = array<i64: 1, 16, 128>}, {transform_indices = @transform_1, window_bounds = array<i64: 1, 16, 128>}, {pipeline_mode = #tpu.pipeline_mode<synchronous>, transform_indices = @transform_2, window_bounds = array<i64: 128, 64>}, {pipeline_mode = #tpu.pipeline_mode<synchronous>, transform_indices = @transform_3, window_bounds = array<i64: 1, 64>}, {pipeline_mode = #tpu.pipeline_mode<synchronous>, transform_indices = @transform_4, window_bounds = array<i64: 128, 64>}, {pipeline_mode = #tpu.pipeline_mode<synchronous>, transform_indices = @transform_5, window_bounds = array<i64: 1, 64>}, {pipeline_mode = #tpu.pipeline_mode<synchronous>, transform_indices = @transform_6, window_bounds = array<i64: 128, 32>}, {pipeline_mode = #tpu.pipeline_mode<synchronous>, transform_indices = @transform_7, window_bounds = array<i64: 1, 32>}, {pipeline_mode = #tpu.pipeline_mode<synchronous>, transform_indices = @transform_8, window_bounds = array<i64: 32, 128>}, {pipeline_mode = #tpu.pipeline_mode<synchronous>, transform_indices = @transform_9, window_bounds = array<i64: 1, 128>}, {pipeline_mode = #tpu.pipeline_mode<synchronous>, transform_indices = @transform_10, window_bounds = array<i64: 128, 128>}, {pipeline_mode = #tpu.pipeline_mode<synchronous>, transform_indices = @transform_11, window_bounds = array<i64: 1, 128>}, {pipeline_mode = #tpu.pipeline_mode<synchronous>, transform_indices = @transform_12, window_bounds = array<i64: 128, 256>}, {pipeline_mode = #tpu.pipeline_mode<synchronous>, transform_indices = @transform_13, window_bounds = array<i64: 1, 256>}, {transform_indices = @transform_14, window_bounds = array<i64: 1, 16, 128>}, {transform_indices = @transform_15, window_bounds = array<i64: 1, 16, 128>}, {transform_indices = @transform_16, window_bounds = array<i64: 1, 1, 256>}]} {
    %c0 = arith.constant 0 : index
    %c0_0 = arith.constant 0 : index
    %c0_1 = arith.constant 0 : index
    %0 = vector.load %arg1[%c0, %c0_0, %c0_1] : memref<1x16x128xf32, #tpu.memory_space<vmem>>, vector<1x16x128xf32>
    %1 = vector.shape_cast %0 : vector<1x16x128xf32> to vector<16x128xf32>
    %c0_2 = arith.constant 0 : index
    %c0_3 = arith.constant 0 : index
    %2 = vector.load %arg3[%c0_2, %c0_3] : memref<128x64xf32, #tpu.memory_space<vmem>>, vector<128x64xf32>
    %cst = arith.constant dense<0.000000e+00> : vector<16x64xf32>
    %3 = tpu.matmul %1, %2, %cst {dimension_numbers = #tpu.dot_dimension_numbers<[1], [0], [0], [1], [0, 0, 1, 1], [], []>} : vector<16x128xf32>, vector<128x64xf32>, vector<16x64xf32> -> vector<16x64xf32>
    %c0_4 = arith.constant 0 : index
    %c0_5 = arith.constant 0 : index
    %4 = vector.load %arg4[%c0_4, %c0_5] : memref<1x64xf32, #tpu.memory_space<vmem>>, vector<1x64xf32>
    %5 = vector.broadcast %4 : vector<1x64xf32> to vector<16x64xf32>
    %6 = arith.addf %3, %5 : vector<16x64xf32>
    %cst_6 = arith.constant 0.000000e+00 : f32
    %7 = vector.broadcast %cst_6 : f32 to vector<16x64xf32>
    %8 = arith.maximumf %6, %7 : vector<16x64xf32>
    %c0_7 = arith.constant 0 : index
    %c0_8 = arith.constant 0 : index
    %c0_9 = arith.constant 0 : index
    %9 = vector.load %arg2[%c0_7, %c0_8, %c0_9] : memref<1x16x128xf32, #tpu.memory_space<vmem>>, vector<1x16x128xf32>
    %10 = vector.shape_cast %9 : vector<1x16x128xf32> to vector<16x128xf32>
    %c0_10 = arith.constant 0 : index
    %c0_11 = arith.constant 0 : index
    %11 = vector.load %arg5[%c0_10, %c0_11] : memref<128x64xf32, #tpu.memory_space<vmem>>, vector<128x64xf32>
    %cst_12 = arith.constant dense<0.000000e+00> : vector<16x64xf32>
    %12 = tpu.matmul %10, %11, %cst_12 {dimension_numbers = #tpu.dot_dimension_numbers<[1], [0], [0], [1], [0, 0, 1, 1], [], []>} : vector<16x128xf32>, vector<128x64xf32>, vector<16x64xf32> -> vector<16x64xf32>
    %c0_13 = arith.constant 0 : index
    %c0_14 = arith.constant 0 : index
    %13 = vector.load %arg6[%c0_13, %c0_14] : memref<1x64xf32, #tpu.memory_space<vmem>>, vector<1x64xf32>
    %14 = vector.broadcast %13 : vector<1x64xf32> to vector<16x64xf32>
    %15 = arith.addf %12, %14 : vector<16x64xf32>
    %cst_15 = arith.constant 0.000000e+00 : f32
    %16 = vector.broadcast %cst_15 : f32 to vector<16x64xf32>
    %17 = arith.maximumf %15, %16 : vector<16x64xf32>
    %18 = tpu.concatenate %8, %17 in 1 : vector<16x64xf32>, vector<16x64xf32> -> vector<16x128xf32>
    %cst_16 = arith.constant dense<0.000000e+00> : vector<128xf32>
    %19 = vector.multi_reduction <add>, %18, %cst_16 [0] : vector<16x128xf32> to vector<128xf32>
    %20 = vector.shape_cast %19 : vector<128xf32> to vector<1x128xf32>
    %cst_17 = arith.constant 1.600000e+01 : f32
    %21 = vector.broadcast %cst_17 : f32 to vector<1x128xf32>
    %22 = arith.divf %20, %21 : vector<1x128xf32>
    %c0_18 = arith.constant 0 : index
    %c0_19 = arith.constant 0 : index
    %23 = vector.load %arg7[%c0_18, %c0_19] : memref<128x32xf32, #tpu.memory_space<vmem>>, vector<128x32xf32>
    %cst_20 = arith.constant dense<0.000000e+00> : vector<1x32xf32>
    %24 = tpu.matmul %22, %23, %cst_20 {dimension_numbers = #tpu.dot_dimension_numbers<[1], [0], [0], [1], [0, 0, 1, 1], [], []>} : vector<1x128xf32>, vector<128x32xf32>, vector<1x32xf32> -> vector<1x32xf32>
    %c0_21 = arith.constant 0 : index
    %c0_22 = arith.constant 0 : index
    %25 = vector.load %arg8[%c0_21, %c0_22] : memref<1x32xf32, #tpu.memory_space<vmem>>, vector<1x32xf32>
    %26 = arith.addf %24, %25 : vector<1x32xf32>
    %cst_23 = arith.constant 0.000000e+00 : f32
    %27 = vector.broadcast %cst_23 : f32 to vector<1x32xf32>
    %28 = arith.maximumf %26, %27 : vector<1x32xf32>
    %c0_24 = arith.constant 0 : index
    %c0_25 = arith.constant 0 : index
    %29 = vector.load %arg9[%c0_24, %c0_25] : memref<32x128xf32, #tpu.memory_space<vmem>>, vector<32x128xf32>
    %cst_26 = arith.constant dense<0.000000e+00> : vector<1x128xf32>
    %30 = tpu.matmul %28, %29, %cst_26 {dimension_numbers = #tpu.dot_dimension_numbers<[1], [0], [0], [1], [0, 0, 1, 1], [], []>} : vector<1x32xf32>, vector<32x128xf32>, vector<1x128xf32> -> vector<1x128xf32>
    %c0_27 = arith.constant 0 : index
    %c0_28 = arith.constant 0 : index
    %31 = vector.load %arg10[%c0_27, %c0_28] : memref<1x128xf32, #tpu.memory_space<vmem>>, vector<1x128xf32>
    %32 = arith.addf %30, %31 : vector<1x128xf32>
    %33 = arith.negf %32 : vector<1x128xf32>
    %34 = math.exp %33 : vector<1x128xf32>
    %cst_29 = arith.constant 1.000000e+00 : f32
    %35 = vector.broadcast %cst_29 : f32 to vector<1x128xf32>
    %36 = arith.addf %35, %34 : vector<1x128xf32>
    %37 = arith.divf %35, %36 : vector<1x128xf32>
    %38 = vector.broadcast %37 : vector<1x128xf32> to vector<16x128xf32>
    %39 = arith.mulf %18, %38 : vector<16x128xf32>
    %c0_30 = arith.constant 0 : index
    %c0_31 = arith.constant 0 : index
    %c0_32 = arith.constant 0 : index
    %40 = vector.load %arg15[%c0_30, %c0_31, %c0_32] : memref<1x16x128xf32, #tpu.memory_space<vmem>>, vector<1x16x128xf32>
    %41 = vector.shape_cast %40 : vector<1x16x128xf32> to vector<16x128xf32>
    %42 = vector.shape_cast %39 : vector<16x128xf32> to vector<1x16x128xf32>
    tpu.vector_store %arg15[%c0_30, %c0_31, %c0_32], %42 {strides = array<i32>} : memref<1x16x128xf32, #tpu.memory_space<vmem>>, vector<1x16x128xf32>,
    %c0_33 = arith.constant 0 : index
    %c0_34 = arith.constant 0 : index
    %43 = vector.load %arg11[%c0_33, %c0_34] : memref<128x128xf32, #tpu.memory_space<vmem>>, vector<128x128xf32>
    %cst_35 = arith.constant dense<0.000000e+00> : vector<16x128xf32>
    %44 = tpu.matmul %39, %43, %cst_35 {dimension_numbers = #tpu.dot_dimension_numbers<[1], [0], [0], [1], [0, 0, 1, 1], [], []>} : vector<16x128xf32>, vector<128x128xf32>, vector<16x128xf32> -> vector<16x128xf32>
    %c0_36 = arith.constant 0 : index
    %c0_37 = arith.constant 0 : index
    %45 = vector.load %arg12[%c0_36, %c0_37] : memref<1x128xf32, #tpu.memory_space<vmem>>, vector<1x128xf32>
    %46 = vector.broadcast %45 : vector<1x128xf32> to vector<16x128xf32>
    %47 = arith.addf %44, %46 : vector<16x128xf32>
    %c0_38 = arith.constant 0 : index
    %c0_39 = arith.constant 0 : index
    %c0_40 = arith.constant 0 : index
    %48 = vector.load %arg16[%c0_38, %c0_39, %c0_40] : memref<1x16x128xf32, #tpu.memory_space<vmem>>, vector<1x16x128xf32>
    %49 = vector.shape_cast %48 : vector<1x16x128xf32> to vector<16x128xf32>
    %50 = vector.shape_cast %47 : vector<16x128xf32> to vector<1x16x128xf32>
    tpu.vector_store %arg16[%c0_38, %c0_39, %c0_40], %50 {strides = array<i32>} : memref<1x16x128xf32, #tpu.memory_space<vmem>>, vector<1x16x128xf32>,
    %cst_41 = arith.constant dense<0.000000e+00> : vector<128xf32>
    %51 = vector.multi_reduction <add>, %39, %cst_41 [0] : vector<16x128xf32> to vector<128xf32>
    %52 = vector.shape_cast %51 : vector<128xf32> to vector<1x128xf32>
    %cst_42 = arith.constant 1.600000e+01 : f32
    %53 = vector.broadcast %cst_42 : f32 to vector<1x128xf32>
    %54 = arith.divf %52, %53 : vector<1x128xf32>
    %c0_43 = arith.constant 0 : index
    %c0_44 = arith.constant 0 : index
    %55 = vector.load %arg13[%c0_43, %c0_44] : memref<128x256xf32, #tpu.memory_space<vmem>>, vector<128x256xf32>
    %cst_45 = arith.constant dense<0.000000e+00> : vector<1x256xf32>
    %56 = tpu.matmul %54, %55, %cst_45 {dimension_numbers = #tpu.dot_dimension_numbers<[1], [0], [0], [1], [0, 0, 1, 1], [], []>} : vector<1x128xf32>, vector<128x256xf32>, vector<1x256xf32> -> vector<1x256xf32>
    %c0_46 = arith.constant 0 : index
    %c0_47 = arith.constant 0 : index
    %57 = vector.load %arg14[%c0_46, %c0_47] : memref<1x256xf32, #tpu.memory_space<vmem>>, vector<1x256xf32>
    %58 = arith.addf %56, %57 : vector<1x256xf32>
    %c0_48 = arith.constant 0 : index
    %c0_49 = arith.constant 0 : index
    %c0_50 = arith.constant 0 : index
    %59 = vector.load %arg17[%c0_48, %c0_49, %c0_50] : memref<1x1x256xf32, #tpu.memory_space<vmem>>, vector<1x1x256xf32>
    %60 = vector.shape_cast %59 : vector<1x1x256xf32> to vector<1x256xf32>
    %61 = vector.shape_cast %58 : vector<1x256xf32> to vector<1x1x256xf32>
    tpu.vector_store %arg17[%c0_48, %c0_49, %c0_50], %61 {strides = array<i32>} : memref<1x1x256xf32, #tpu.memory_space<vmem>>, vector<1x1x256xf32>,
    return
  }
  func.func @transform_0(%arg0: i32) -> (i32, i32, i32) {
    %c0_i32 = arith.constant 0 : i32
    %c0_i32_0 = arith.constant 0 : i32
    %c0_i32_1 = arith.constant 0 : i32
    return %arg0, %c0_i32, %c0_i32_0 : i32, i32, i32
  }
  func.func @transform_1(%arg0: i32) -> (i32, i32, i32) {
    %c0_i32 = arith.constant 0 : i32
    %c0_i32_0 = arith.constant 0 : i32
    %c0_i32_1 = arith.constant 0 : i32
    return %arg0, %c0_i32, %c0_i32_0 : i32, i32, i32
  }
  func.func @transform_2(%arg0: i32) -> (i32, i32) {
    %c0_i32 = arith.constant 0 : i32
    %c0_i32_0 = arith.constant 0 : i32
    %c0_i32_1 = arith.constant 0 : i32
    return %c0_i32, %c0_i32_0 : i32, i32
  }
  func.func @transform_3(%arg0: i32) -> (i32, i32) {
    %c0_i32 = arith.constant 0 : i32
    %c0_i32_0 = arith.constant 0 : i32
    %c0_i32_1 = arith.constant 0 : i32
    return %c0_i32, %c0_i32_0 : i32, i32
  }
  func.func @transform_4(%arg0: i32) -> (i32, i32) {
    %c0_i32 = arith.constant 0 : i32
    %c0_i32_0 = arith.constant 0 : i32
    %c0_i32_1 = arith.constant 0 : i32
    return %c0_i32, %c0_i32_0 : i32, i32
  }
  func.func @transform_5(%arg0: i32) -> (i32, i32) {
    %c0_i32 = arith.constant 0 : i32
    %c0_i32_0 = arith.constant 0 : i32
    %c0_i32_1 = arith.constant 0 : i32
    return %c0_i32, %c0_i32_0 : i32, i32
  }
  func.func @transform_6(%arg0: i32) -> (i32, i32) {
    %c0_i32 = arith.constant 0 : i32
    %c0_i32_0 = arith.constant 0 : i32
    %c0_i32_1 = arith.constant 0 : i32
    return %c0_i32, %c0_i32_0 : i32, i32
  }
  func.func @transform_7(%arg0: i32) -> (i32, i32) {
    %c0_i32 = arith.constant 0 : i32
    %c0_i32_0 = arith.constant 0 : i32
    %c0_i32_1 = arith.constant 0 : i32
    return %c0_i32, %c0_i32_0 : i32, i32
  }
  func.func @transform_8(%arg0: i32) -> (i32, i32) {
    %c0_i32 = arith.constant 0 : i32
    %c0_i32_0 = arith.constant 0 : i32
    %c0_i32_1 = arith.constant 0 : i32
    return %c0_i32, %c0_i32_0 : i32, i32
  }
  func.func @transform_9(%arg0: i32) -> (i32, i32) {
    %c0_i32 = arith.constant 0 : i32
    %c0_i32_0 = arith.constant 0 : i32
    %c0_i32_1 = arith.constant 0 : i32
    return %c0_i32, %c0_i32_0 : i32, i32
  }
  func.func @transform_10(%arg0: i32) -> (i32, i32) {
    %c0_i32 = arith.constant 0 : i32
    %c0_i32_0 = arith.constant 0 : i32
    %c0_i32_1 = arith.constant 0 : i32
    return %c0_i32, %c0_i32_0 : i32, i32
  }
  func.func @transform_11(%arg0: i32) -> (i32, i32) {
    %c0_i32 = arith.constant 0 : i32
    %c0_i32_0 = arith.constant 0 : i32
    %c0_i32_1 = arith.constant 0 : i32
    return %c0_i32, %c0_i32_0 : i32, i32
  }
  func.func @transform_12(%arg0: i32) -> (i32, i32) {
    %c0_i32 = arith.constant 0 : i32
    %c0_i32_0 = arith.constant 0 : i32
    %c0_i32_1 = arith.constant 0 : i32
    return %c0_i32, %c0_i32_0 : i32, i32
  }
  func.func @transform_13(%arg0: i32) -> (i32, i32) {
    %c0_i32 = arith.constant 0 : i32
    %c0_i32_0 = arith.constant 0 : i32
    %c0_i32_1 = arith.constant 0 : i32
    return %c0_i32, %c0_i32_0 : i32, i32
  }
  func.func @transform_14(%arg0: i32) -> (i32, i32, i32) {
    %c0_i32 = arith.constant 0 : i32
    %c0_i32_0 = arith.constant 0 : i32
    %c0_i32_1 = arith.constant 0 : i32
    return %arg0, %c0_i32, %c0_i32_0 : i32, i32, i32
  }
  func.func @transform_15(%arg0: i32) -> (i32, i32, i32) {
    %c0_i32 = arith.constant 0 : i32
    %c0_i32_0 = arith.constant 0 : i32
    %c0_i32_1 = arith.constant 0 : i32
    return %arg0, %c0_i32, %c0_i32_0 : i32, i32, i32
  }
  func.func @transform_16(%arg0: i32) -> (i32, i32, i32) {
    %c0_i32 = arith.constant 0 : i32
    %c0_i32_0 = arith.constant 0 : i32
    %c0_i32_1 = arith.constant 0 : i32
    return %arg0, %c0_i32, %c0_i32_0 : i32, i32, i32
  }
}

</mosaic_0001>

<llo_original>
// kernel: tpu_custom_call.1
$region0: #{tpu_custom_call.1}
  #allocation0 [shape = 'u32[]', space=smem, size = 0x4, offset = 0x4, fixed_abs, tag = 'smem constant byte address 0x4 - core index']
  #allocation1 [shape = 'u32[144,128]{1,0:T(1,128)}', space=vmem, size = 0x12000, scoped, tag = 'internal scratch']
  %s0 = inlined_call_operand.vmem [shape: f32[2,16,128], index: 0, kind: input, shape index: {}]
  %s1 = inlined_call_operand.vmem [shape: f32[2,16,128], index: 1, kind: input, shape index: {}]
  %s2 = inlined_call_operand.vmem [shape: f32[128,64], index: 2, kind: input, shape index: {}]
  %s3 = inlined_call_operand.vmem [shape: f32[1,64], index: 3, kind: input, shape index: {}]
  %s4 = inlined_call_operand.vmem [shape: f32[128,64], index: 4, kind: input, shape index: {}]
  %s5 = inlined_call_operand.vmem [shape: f32[1,64], index: 5, kind: input, shape index: {}]
  %s6 = inlined_call_operand.vmem [shape: f32[128,32], index: 6, kind: input, shape index: {}]
  %s7 = inlined_call_operand.vmem [shape: f32[1,32], index: 7, kind: input, shape index: {}]
  %s8 = inlined_call_operand.hbm [shape: f32[32,128], index: 8, kind: input, shape index: {}]
  %s9 = inlined_call_operand.vmem [shape: f32[1,128], index: 9, kind: input, shape index: {}]
  %s10 = inlined_call_operand.vmem [shape: f32[128,128], index: 10, kind: input, shape index: {}]
  %s11 = inlined_call_operand.vmem [shape: f32[1,128], index: 11, kind: input, shape index: {}]
  %s12 = inlined_call_operand.vmem [shape: f32[128,256], index: 12, kind: input, shape index: {}]
  %s13 = inlined_call_operand.vmem [shape: f32[1,256], index: 13, kind: input, shape index: {}]
  %s14 = inlined_call_operand.hbm [shape: f32[2,16,128], index: 14, kind: output, shape index: {0}]
  %s15 = inlined_call_operand.hbm [shape: f32[2,16,128], index: 15, kind: output, shape index: {1}]
  %s16 = inlined_call_operand.hbm [shape: f32[2,1,256], index: 16, kind: output, shape index: {2}]
  %17 = xla_tuple %s14, %s15, %s16
  %s18 = sld [smem:[#allocation0]]
  $region109: #{tpu_custom_call.1} parent=0
    _
  %s20 = ssub.s32 1, %s18
  %s21 = scalar_select 0, %s20, %s18
  $region1: #{tpu_custom_call.1} parent=0
    #allocation2 [shape = 'u8[16384]{0}', space=vmem, size = 0x4000, scoped, tag = 'input window, operand 8, single buffered']
    #allocation3 [shape = 's32[2]{0}', space=sflag, size = 0x8, scoped, tag = 'scoped memory for tpu_custom_call.1']
    #allocation4 [shape = 's32[2]{0}', space=sflag, size = 0x8, scoped, tag = 'scoped memory for tpu_custom_call.1']
    #allocation5 [shape = 'u8[16384]{0}', space=vmem, size = 0x4000, scoped, tag = 'output window, operand 0']
    #allocation6 [shape = 'u8[16384]{0}', space=vmem, size = 0x4000, scoped, tag = 'output window, operand 1']
    #allocation7 [shape = 's32[2]{0}', space=sflag, size = 0x8, scoped, tag = 'scoped memory for tpu_custom_call.1']
    #allocation8 [shape = 'u8[2048]{0}', space=vmem, size = 0x800, scoped, tag = 'output window, operand 2']
    %22 = vsyncpa [#allocation3], 0
    %23 = vsyncpa [#allocation4], 0
    %s24 = scalar_lea.sflag [#allocation4], 1
    %25 = vsyncpa %s24, 0
    %26 = vsyncpa [#allocation7], 0
    %s27 = scalar_lea.sflag [#allocation7], 1
    %28 = vsyncpa %s27, 0
    loop: start=0, step=1, limit=4
    $region2: #{tpu_custom_call.1} parent=1 // loop_pre_header
      _
    $region3: #{tpu_custom_call.1} parent=1 // loop_header
      %s30 = sphi 0, %s34
      %p31 = scmp.ge.s32.totalorder %s30, 4
      %s40 = sphi 0, %s42
      %s43 = sphi 0, %s40
      %s44 = sphi 0, %s43
      %s60 = sphi 0, %s44
      %s66 = sphi 0, %s68
      %s69 = sphi 0, %s66
      %s70 = sphi 0, %s69
      %s86 = sphi 0, %s70
      %s90 = sphi 0, %s90
      %s92 = sphi 0, %s90
      %s93 = sphi 0, %s92
      %s107 = sphi 0, %s93
      %s111 = sphi 0, %s111
      %s113 = sphi 0, %s111
      %s114 = sphi 0, %s113
      %s128 = sphi 0, %s114
      %s132 = sphi 0, %s132
      %s134 = sphi 0, %s132
      %s135 = sphi 0, %s134
      %s149 = sphi 0, %s135
      %s153 = sphi 0, %s153
      %s155 = sphi 0, %s153
      %s156 = sphi 0, %s155
      %s170 = sphi 0, %s156
      %s174 = sphi 0, %s174
      %s176 = sphi 0, %s174
      %s177 = sphi 0, %s176
      %s191 = sphi 0, %s177
      %s195 = sphi 0, %s195
      %s197 = sphi 0, %s195
      %s198 = sphi 0, %s197
      %s212 = sphi 0, %s198
      %s216 = sphi 0, %s216
      %s218 = sphi 0, %s216
      %s219 = sphi 0, %s218
      %s233 = sphi 0, %s219
      %s237 = sphi 0, %s237
      %s239 = sphi 0, %s237
      %s240 = sphi 0, %s239
      %s254 = sphi 0, %s240
      %s258 = sphi 0, %s258
      %s260 = sphi 0, %s258
      %s261 = sphi 0, %s260
      %s275 = sphi 0, %s261
      %s279 = sphi 0, %s279
      %s281 = sphi 0, %s279
      %s282 = sphi 0, %s281
      %s296 = sphi 0, %s282
      %s300 = sphi 0, %s300
      %s302 = sphi 0, %s300
      %s303 = sphi 0, %s302
      %s317 = sphi 0, %s303
      %s321 = sphi 0, %s321
      %s323 = sphi 0, %s321
      %s324 = sphi 0, %s323
      %s338 = sphi 0, %s324
      %s344 = sphi 0, %s346
      %s347 = sphi 0, %s344
      %s348 = sphi 0, %s347
      %s364 = sphi 0, %s348
      %s370 = sphi 0, %s372
      %s373 = sphi 0, %s370
      %s374 = sphi 0, %s373
      %s390 = sphi 0, %s374
      %s396 = sphi 0, %s398
      %s399 = sphi 0, %s396
      %s400 = sphi 0, %s399
      %s416 = sphi 0, %s400
    $region4: #{tpu_custom_call.1} parent=1 // loop_header_branch
      %33 = sbr.rel (%p31) target = $region8
    $region5: #{tpu_custom_call.1} parent=1 // loop_body
      %s35 = ssub.s32 %s30, 1
      %s36 = ssub.s32 %s30, 2
      %s37 = sadd.s32 %s30, 1
      %s38 = ssub.s32 %s30, %s37
      %p39 = scmp.eq.s32.totalorder %s38, 0
      %s41 = sadd.s32 %s40, 1
      %s42 = scalar_select %p39, %s40, %s41
      %p45 = pneg %p39
      %p46 = scmp.eq.s32.totalorder %s30, 1
      %p47 = por %p45, %p46
      %p48 = scmp.ne.s32.totalorder %s40, %s43
      %p49 = scmp.eq.s32.totalorder %s30, 0
      %p50 = por %p48, %p49
      %p51 = scmp.ne.s32.totalorder %s40, %s43
      %p52 = scmp.eq.s32.totalorder %s35, 1
      %p53 = por %p51, %p52
      %p54 = scmp.ne.s32.totalorder %s43, %s44
      %p55 = scmp.eq.s32.totalorder %s35, 0
      %p56 = por %p54, %p55
      %p57 = scmp.ne.s32.totalorder %s43, %s44
      %p58 = scmp.eq.s32.totalorder %s36, 1
      %p59 = por %p57, %p58
      %p61 = scmp.ne.s32.totalorder %s44, %s60
      %p62 = scmp.eq.s32.totalorder %s36, 0
      %p63 = por %p61, %p62
      %s64 = ssub.s32 %s30, %s37
      %p65 = scmp.eq.s32.totalorder %s64, 0
      %s67 = sadd.s32 %s66, 1
      %s68 = scalar_select %p65, %s66, %s67
      %p71 = pneg %p65
      %p72 = scmp.eq.s32.totalorder %s30, 1
      %p73 = por %p71, %p72
      %p74 = scmp.ne.s32.totalorder %s66, %s69
      %p75 = scmp.eq.s32.totalorder %s30, 0
      %p76 = por %p74, %p75
      %p77 = scmp.ne.s32.totalorder %s66, %s69
      %p78 = scmp.eq.s32.totalorder %s35, 1
      %p79 = por %p77, %p78
      %p80 = scmp.ne.s32.totalorder %s69, %s70
      %p81 = scmp.eq.s32.totalorder %s35, 0
      %p82 = por %p80, %p81
      %p83 = scmp.ne.s32.totalorder %s69, %s70
      %p84 = scmp.eq.s32.totalorder %s36, 1
      %p85 = por %p83, %p84
      %p87 = scmp.ne.s32.totalorder %s70, %s86
      %p88 = scmp.eq.s32.totalorder %s36, 0
      %p89 = por %p87, %p88
      %s91 = sadd.s32 %s90, 1
      %p94 = scmp.eq.s32.totalorder %s30, 1
      %p95 = scmp.ne.s32.totalorder %s90, %s92
      %p96 = scmp.eq.s32.totalorder %s30, 0
      %p97 = por %p95, %p96
      %p98 = scmp.ne.s32.totalorder %s90, %s92
      %p99 = scmp.eq.s32.totalorder %s35, 1
      %p100 = por %p98, %p99
      %p101 = scmp.ne.s32.totalorder %s92, %s93
      %p102 = scmp.eq.s32.totalorder %s35, 0
      %p103 = por %p101, %p102
      %p104 = scmp.ne.s32.totalorder %s92, %s93
      %p105 = scmp.eq.s32.totalorder %s36, 1
      %p106 = por %p104, %p105
      %p108 = scmp.ne.s32.totalorder %s93, %s107
      %p109 = scmp.eq.s32.totalorder %s36, 0
      %p110 = por %p108, %p109
      %s112 = sadd.s32 %s111, 1
      %p115 = scmp.eq.s32.totalorder %s30, 1
      %p116 = scmp.ne.s32.totalorder %s111, %s113
      %p117 = scmp.eq.s32.totalorder %s30, 0
      %p118 = por %p116, %p117
      %p119 = scmp.ne.s32.totalorder %s111, %s113
      %p120 = scmp.eq.s32.totalorder %s35, 1
      %p121 = por %p119, %p120
      %p122 = scmp.ne.s32.totalorder %s113, %s114
      %p123 = scmp.eq.s32.totalorder %s35, 0
      %p124 = por %p122, %p123
      %p125 = scmp.ne.s32.totalorder %s113, %s114
      %p126 = scmp.eq.s32.totalorder %s36, 1
      %p127 = por %p125, %p126
      %p129 = scmp.ne.s32.totalorder %s114, %s128
      %p130 = scmp.eq.s32.totalorder %s36, 0
      %p131 = por %p129, %p130
      %s133 = sadd.s32 %s132, 1
      %p136 = scmp.eq.s32.totalorder %s30, 1
      %p137 = scmp.ne.s32.totalorder %s132, %s134
      %p138 = scmp.eq.s32.totalorder %s30, 0
      %p139 = por %p137, %p138
      %p140 = scmp.ne.s32.totalorder %s132, %s134
      %p141 = scmp.eq.s32.totalorder %s35, 1
      %p142 = por %p140, %p141
      %p143 = scmp.ne.s32.totalorder %s134, %s135
      %p144 = scmp.eq.s32.totalorder %s35, 0
      %p145 = por %p143, %p144
      %p146 = scmp.ne.s32.totalorder %s134, %s135
      %p147 = scmp.eq.s32.totalorder %s36, 1
      %p148 = por %p146, %p147
      %p150 = scmp.ne.s32.totalorder %s135, %s149
      %p151 = scmp.eq.s32.totalorder %s36, 0
      %p152 = por %p150, %p151
      %s154 = sadd.s32 %s153, 1
      %p157 = scmp.eq.s32.totalorder %s30, 1
      %p158 = scmp.ne.s32.totalorder %s153, %s155
      %p159 = scmp.eq.s32.totalorder %s30, 0
      %p160 = por %p158, %p159
      %p161 = scmp.ne.s32.totalorder %s153, %s155
      %p162 = scmp.eq.s32.totalorder %s35, 1
      %p163 = por %p161, %p162
      %p164 = scmp.ne.s32.totalorder %s155, %s156
      %p165 = scmp.eq.s32.totalorder %s35, 0
      %p166 = por %p164, %p165
      %p167 = scmp.ne.s32.totalorder %s155, %s156
      %p168 = scmp.eq.s32.totalorder %s36, 1
      %p169 = por %p167, %p168
      %p171 = scmp.ne.s32.totalorder %s156, %s170
      %p172 = scmp.eq.s32.totalorder %s36, 0
      %p173 = por %p171, %p172
      %s175 = sadd.s32 %s174, 1
      %p178 = scmp.eq.s32.totalorder %s30, 1
      %p179 = scmp.ne.s32.totalorder %s174, %s176
      %p180 = scmp.eq.s32.totalorder %s30, 0
      %p181 = por %p179, %p180
      %p182 = scmp.ne.s32.totalorder %s174, %s176
      %p183 = scmp.eq.s32.totalorder %s35, 1
      %p184 = por %p182, %p183
      %p185 = scmp.ne.s32.totalorder %s176, %s177
      %p186 = scmp.eq.s32.totalorder %s35, 0
      %p187 = por %p185, %p186
      %p188 = scmp.ne.s32.totalorder %s176, %s177
      %p189 = scmp.eq.s32.totalorder %s36, 1
      %p190 = por %p188, %p189
      %p192 = scmp.ne.s32.totalorder %s177, %s191
      %p193 = scmp.eq.s32.totalorder %s36, 0
      %p194 = por %p192, %p193
      %s196 = sadd.s32 %s195, 1
      %p199 = scmp.eq.s32.totalorder %s30, 1
      %p200 = scmp.ne.s32.totalorder %s195, %s197
      %p201 = scmp.eq.s32.totalorder %s30, 0
      %p202 = por %p200, %p201
      %p203 = scmp.ne.s32.totalorder %s195, %s197
      %p204 = scmp.eq.s32.totalorder %s35, 1
      %p205 = por %p203, %p204
      %p206 = scmp.ne.s32.totalorder %s197, %s198
      %p207 = scmp.eq.s32.totalorder %s35, 0
      %p208 = por %p206, %p207
      %p209 = scmp.ne.s32.totalorder %s197, %s198
      %p210 = scmp.eq.s32.totalorder %s36, 1
      %p211 = por %p209, %p210
      %p213 = scmp.ne.s32.totalorder %s198, %s212
      %p214 = scmp.eq.s32.totalorder %s36, 0
      %p215 = por %p213, %p214
      %s217 = sadd.s32 %s216, 1
      %p220 = scmp.eq.s32.totalorder %s30, 1
      %p221 = scmp.ne.s32.totalorder %s216, %s218
      %p222 = scmp.eq.s32.totalorder %s30, 0
      %p223 = por %p221, %p222
      %p224 = scmp.ne.s32.totalorder %s216, %s218
      %p225 = scmp.eq.s32.totalorder %s35, 1
      %p226 = por %p224, %p225
      %p227 = scmp.ne.s32.totalorder %s218, %s219
      %p228 = scmp.eq.s32.totalorder %s35, 0
      %p229 = por %p227, %p228
      %p230 = scmp.ne.s32.totalorder %s218, %s219
      %p231 = scmp.eq.s32.totalorder %s36, 1
      %p232 = por %p230, %p231
      %p234 = scmp.ne.s32.totalorder %s219, %s233
      %p235 = scmp.eq.s32.totalorder %s36, 0
      %p236 = por %p234, %p235
      %s238 = sadd.s32 %s237, 1
      %p241 = scmp.eq.s32.totalorder %s30, 1
      %p242 = scmp.ne.s32.totalorder %s237, %s239
      %p243 = scmp.eq.s32.totalorder %s30, 0
      %p244 = por %p242, %p243
      %p245 = scmp.ne.s32.totalorder %s237, %s239
      %p246 = scmp.eq.s32.totalorder %s35, 1
      %p247 = por %p245, %p246
      %p248 = scmp.ne.s32.totalorder %s239, %s240
      %p249 = scmp.eq.s32.totalorder %s35, 0
      %p250 = por %p248, %p249
      %p251 = scmp.ne.s32.totalorder %s239, %s240
      %p252 = scmp.eq.s32.totalorder %s36, 1
      %p253 = por %p251, %p252
      %p255 = scmp.ne.s32.totalorder %s240, %s254
      %p256 = scmp.eq.s32.totalorder %s36, 0
      %p257 = por %p255, %p256
      %s259 = sadd.s32 %s258, 1
      %p262 = scmp.eq.s32.totalorder %s30, 1
      %p263 = scmp.ne.s32.totalorder %s258, %s260
      %p264 = scmp.eq.s32.totalorder %s30, 0
      %p265 = por %p263, %p264
      %p266 = scmp.ne.s32.totalorder %s258, %s260
      %p267 = scmp.eq.s32.totalorder %s35, 1
      %p268 = por %p266, %p267
      %p269 = scmp.ne.s32.totalorder %s260, %s261
      %p270 = scmp.eq.s32.totalorder %s35, 0
      %p271 = por %p269, %p270
      %p272 = scmp.ne.s32.totalorder %s260, %s261
      %p273 = scmp.eq.s32.totalorder %s36, 1
      %p274 = por %p272, %p273
      %p276 = scmp.ne.s32.totalorder %s261, %s275
      %p277 = scmp.eq.s32.totalorder %s36, 0
      %p278 = por %p276, %p277
      %s280 = sadd.s32 %s279, 1
      %p283 = scmp.eq.s32.totalorder %s30, 1
      %p284 = scmp.ne.s32.totalorder %s279, %s281
      %p285 = scmp.eq.s32.totalorder %s30, 0
      %p286 = por %p284, %p285
      %p287 = scmp.ne.s32.totalorder %s279, %s281
      %p288 = scmp.eq.s32.totalorder %s35, 1
      %p289 = por %p287, %p288
      %p290 = scmp.ne.s32.totalorder %s281, %s282
      %p291 = scmp.eq.s32.totalorder %s35, 0
      %p292 = por %p290, %p291
      %p293 = scmp.ne.s32.totalorder %s281, %s282
      %p294 = scmp.eq.s32.totalorder %s36, 1
      %p295 = por %p293, %p294
      %p297 = scmp.ne.s32.totalorder %s282, %s296
      %p298 = scmp.eq.s32.totalorder %s36, 0
      %p299 = por %p297, %p298
      %s301 = sadd.s32 %s300, 1
      %p304 = scmp.eq.s32.totalorder %s30, 1
      %p305 = scmp.ne.s32.totalorder %s300, %s302
      %p306 = scmp.eq.s32.totalorder %s30, 0
      %p307 = por %p305, %p306
      %p308 = scmp.ne.s32.totalorder %s300, %s302
      %p309 = scmp.eq.s32.totalorder %s35, 1
      %p310 = por %p308, %p309
      %p311 = scmp.ne.s32.totalorder %s302, %s303
      %p312 = scmp.eq.s32.totalorder %s35, 0
      %p313 = por %p311, %p312
      %p314 = scmp.ne.s32.totalorder %s302, %s303
      %p315 = scmp.eq.s32.totalorder %s36, 1
      %p316 = por %p314, %p315
      %p318 = scmp.ne.s32.totalorder %s303, %s317
      %p319 = scmp.eq.s32.totalorder %s36, 0
      %p320 = por %p318, %p319
      %s322 = sadd.s32 %s321, 1
      %p325 = scmp.eq.s32.totalorder %s30, 1
      %p326 = scmp.ne.s32.totalorder %s321, %s323
      %p327 = scmp.eq.s32.totalorder %s30, 0
      %p328 = por %p326, %p327
      %p329 = scmp.ne.s32.totalorder %s321, %s323
      %p330 = scmp.eq.s32.totalorder %s35, 1
      %p331 = por %p329, %p330
      %p332 = scmp.ne.s32.totalorder %s323, %s324
      %p333 = scmp.eq.s32.totalorder %s35, 0
      %p334 = por %p332, %p333
      %p335 = scmp.ne.s32.totalorder %s323, %s324
      %p336 = scmp.eq.s32.totalorder %s36, 1
      %p337 = por %p335, %p336
      %p339 = scmp.ne.s32.totalorder %s324, %s338
      %p340 = scmp.eq.s32.totalorder %s36, 0
      %p341 = por %p339, %p340
      %s342 = ssub.s32 %s30, %s37
      %p343 = scmp.eq.s32.totalorder %s342, 0
      %s345 = sadd.s32 %s344, 1
      %s346 = scalar_select %p343, %s344, %s345
      %p349 = pneg %p343
      %p350 = scmp.eq.s32.totalorder %s30, 1
      %p351 = por %p349, %p350
      %p352 = scmp.ne.s32.totalorder %s344, %s347
      %p353 = scmp.eq.s32.totalorder %s30, 0
      %p354 = por %p352, %p353
      %p355 = scmp.ne.s32.totalorder %s344, %s347
      %p356 = scmp.eq.s32.totalorder %s35, 1
      %p357 = por %p355, %p356
      %p358 = scmp.ne.s32.totalorder %s347, %s348
      %p359 = scmp.eq.s32.totalorder %s35, 0
      %p360 = por %p358, %p359
      %p361 = scmp.ne.s32.totalorder %s347, %s348
      %p362 = scmp.eq.s32.totalorder %s36, 1
      %p363 = por %p361, %p362
      %p365 = scmp.ne.s32.totalorder %s348, %s364
      %p366 = scmp.eq.s32.totalorder %s36, 0
      %p367 = por %p365, %p366
      %s368 = ssub.s32 %s30, %s37
      %p369 = scmp.eq.s32.totalorder %s368, 0
      %s371 = sadd.s32 %s370, 1
      %s372 = scalar_select %p369, %s370, %s371
      %p375 = pneg %p369
      %p376 = scmp.eq.s32.totalorder %s30, 1
      %p377 = por %p375, %p376
      %p378 = scmp.ne.s32.totalorder %s370, %s373
      %p379 = scmp.eq.s32.totalorder %s30, 0
      %p380 = por %p378, %p379
      %p381 = scmp.ne.s32.totalorder %s370, %s373
      %p382 = scmp.eq.s32.totalorder %s35, 1
      %p383 = por %p381, %p382
      %p384 = scmp.ne.s32.totalorder %s373, %s374
      %p385 = scmp.eq.s32.totalorder %s35, 0
      %p386 = por %p384, %p385
      %p387 = scmp.ne.s32.totalorder %s373, %s374
      %p388 = scmp.eq.s32.totalorder %s36, 1
      %p389 = por %p387, %p388
      %p391 = scmp.ne.s32.totalorder %s374, %s390
      %p392 = scmp.eq.s32.totalorder %s36, 0
      %p393 = por %p391, %p392
      %s394 = ssub.s32 %s30, %s37
      %p395 = scmp.eq.s32.totalorder %s394, 0
      %s397 = sadd.s32 %s396, 1
      %s398 = scalar_select %p395, %s396, %s397
      %p401 = pneg %p395
      %p402 = scmp.eq.s32.totalorder %s30, 1
      %p403 = por %p401, %p402
      %p404 = scmp.ne.s32.totalorder %s396, %s399
      %p405 = scmp.eq.s32.totalorder %s30, 0
      %p406 = por %p404, %p405
      %p407 = scmp.ne.s32.totalorder %s396, %s399
      %p408 = scmp.eq.s32.totalorder %s35, 1
      %p409 = por %p407, %p408
      %p410 = scmp.ne.s32.totalorder %s399, %s400
      %p411 = scmp.eq.s32.totalorder %s35, 0
      %p412 = por %p410, %p411
      %p413 = scmp.ne.s32.totalorder %s399, %s400
      %p414 = scmp.eq.s32.totalorder %s36, 1
      %p415 = por %p413, %p414
      %p417 = scmp.ne.s32.totalorder %s400, %s416
      %p418 = scmp.eq.s32.totalorder %s36, 0
      %p419 = por %p417, %p418
      %p420 = scmp.le.s32.totalorder 1, %s30
      %p421 = scmp.lt.s32.totalorder %s30, 3
      %p422 = pnand %p420, %p421
      %p423 = pneg %p422
      // Predicated region
      $region9: #{tpu_custom_call.1} parent=5 // pred_check
        _
      $region10: #{tpu_custom_call.1} parent=5 // pred_check_branch
        %425 = sbr.rel (%p422) target = $region12
      $region11: #{tpu_custom_call.1} parent=5 // pred_region
        %s426 = ssub.s32 %s30, 1
        // Predicated region
        $region13: #{tpu_custom_call.1} parent=11 // pred_check
          %p427 = pneg %p103
        $region14: #{tpu_custom_call.1} parent=11 // pred_check_branch
          %429 = sbr.rel (%p427) target = $region16
        $region15: #{tpu_custom_call.1} parent=11 // pred_region
          _
        $region16: #{tpu_custom_call.1} parent=11 // pred_fallthru
          _
        // Predicated region
        $region17: #{tpu_custom_call.1} parent=11 // pred_check
          %p430 = pneg %p124
        $region18: #{tpu_custom_call.1} parent=11 // pred_check_branch
          %432 = sbr.rel (%p430) target = $region20
        $region19: #{tpu_custom_call.1} parent=11 // pred_region
          _
        $region20: #{tpu_custom_call.1} parent=11 // pred_fallthru
          _
        // Predicated region
        $region21: #{tpu_custom_call.1} parent=11 // pred_check
          %p433 = pneg %p145
        $region22: #{tpu_custom_call.1} parent=11 // pred_check_branch
          %435 = sbr.rel (%p433) target = $region24
        $region23: #{tpu_custom_call.1} parent=11 // pred_region
          _
        $region24: #{tpu_custom_call.1} parent=11 // pred_fallthru
          _
        // Predicated region
        $region25: #{tpu_custom_call.1} parent=11 // pred_check
          %p436 = pneg %p166
        $region26: #{tpu_custom_call.1} parent=11 // pred_check_branch
          %438 = sbr.rel (%p436) target = $region28
        $region27: #{tpu_custom_call.1} parent=11 // pred_region
          _
        $region28: #{tpu_custom_call.1} parent=11 // pred_fallthru
          _
        // Predicated region
        $region29: #{tpu_custom_call.1} parent=11 // pred_check
          %p439 = pneg %p187
        $region30: #{tpu_custom_call.1} parent=11 // pred_check_branch
          %441 = sbr.rel (%p439) target = $region32
        $region31: #{tpu_custom_call.1} parent=11 // pred_region
          _
        $region32: #{tpu_custom_call.1} parent=11 // pred_fallthru
          _
        // Predicated region
        $region33: #{tpu_custom_call.1} parent=11 // pred_check
          %p442 = pneg %p208
        $region34: #{tpu_custom_call.1} parent=11 // pred_check_branch
          %444 = sbr.rel (%p442) target = $region36
        $region35: #{tpu_custom_call.1} parent=11 // pred_region
          _
        $region36: #{tpu_custom_call.1} parent=11 // pred_fallthru
          _
        // Predicated region
        $region37: #{tpu_custom_call.1} parent=11 // pred_check
          %p445 = pneg %p229
        $region38: #{tpu_custom_call.1} parent=11 // pred_check_branch
          %447 = sbr.rel (%p445) target = $region40
        $region39: #{tpu_custom_call.1} parent=11 // pred_region
          %s449 = ssub.s32 512, 512
          %450 = vsyncadd [#allocation3], %s449
          %s451 = sshll.u32 [#allocation2], 4
          %s452 = int_to_ptr.vmem [resolvable:$true] %s451
          %457 = dma.hbm_to_vmem [thread:$0]  %s8, 512, %s452, [#allocation3], 128, 128, 8
        $region40: #{tpu_custom_call.1} parent=11 // pred_fallthru
          _
        // Predicated region
        $region41: #{tpu_custom_call.1} parent=11 // pred_check
          %p458 = pneg %p250
        $region42: #{tpu_custom_call.1} parent=11 // pred_check_branch
          %460 = sbr.rel (%p458) target = $region44
        $region43: #{tpu_custom_call.1} parent=11 // pred_region
          _
        $region44: #{tpu_custom_call.1} parent=11 // pred_fallthru
          _
        // Predicated region
        $region45: #{tpu_custom_call.1} parent=11 // pred_check
          %p461 = pneg %p271
        $region46: #{tpu_custom_call.1} parent=11 // pred_check_branch
          %463 = sbr.rel (%p461) target = $region48
        $region47: #{tpu_custom_call.1} parent=11 // pred_region
          _
        $region48: #{tpu_custom_call.1} parent=11 // pred_fallthru
          _
        // Predicated region
        $region49: #{tpu_custom_call.1} parent=11 // pred_check
          %p464 = pneg %p292
        $region50: #{tpu_custom_call.1} parent=11 // pred_check_branch
          %466 = sbr.rel (%p464) target = $region52
        $region51: #{tpu_custom_call.1} parent=11 // pred_region
          _
        $region52: #{tpu_custom_call.1} parent=11 // pred_fallthru
          _
        // Predicated region
        $region53: #{tpu_custom_call.1} parent=11 // pred_check
          %p467 = pneg %p313
        $region54: #{tpu_custom_call.1} parent=11 // pred_check_branch
          %469 = sbr.rel (%p467) target = $region56
        $region55: #{tpu_custom_call.1} parent=11 // pred_region
          _
        $region56: #{tpu_custom_call.1} parent=11 // pred_fallthru
          _
        // Predicated region
        $region57: #{tpu_custom_call.1} parent=11 // pred_check
          %p470 = pneg %p334
        $region58: #{tpu_custom_call.1} parent=11 // pred_check_branch
          %472 = sbr.rel (%p470) target = $region60
        $region59: #{tpu_custom_call.1} parent=11 // pred_region
          _
        $region60: #{tpu_custom_call.1} parent=11 // pred_fallthru
          _
      $region12: #{tpu_custom_call.1} parent=5 // pred_fallthru
        _
      %p473 = scmp.lt.s32.totalorder %s30, 2
      // Predicated region
      $region61: #{tpu_custom_call.1} parent=5 // pred_check
        %p474 = pneg %p473
      $region62: #{tpu_custom_call.1} parent=5 // pred_check_branch
        %476 = sbr.rel (%p474) target = $region64
      $region63: #{tpu_custom_call.1} parent=5 // pred_region
        // Predicated region
        $region65: #{tpu_custom_call.1} parent=63 // pred_check
          %p477 = pneg %p50
        $region66: #{tpu_custom_call.1} parent=63 // pred_check_branch
          %479 = sbr.rel (%p477) target = $region68
        $region67: #{tpu_custom_call.1} parent=63 // pred_region
          %p480 = scmp.lt.s32.totalorder %s30, 1
          %s481 = scalar_select %p480, %s30, 1
          %s482 = smul.addr %s481, 2
          %s483 = smul.addr %s482, 8
          %s484 = scalar_lea.vmem %s0, %s483
        $region68: #{tpu_custom_call.1} parent=63 // pred_fallthru
          _
        // Predicated region
        $region69: #{tpu_custom_call.1} parent=63 // pred_check
          %p485 = pneg %p76
        $region70: #{tpu_custom_call.1} parent=63 // pred_check_branch
          %487 = sbr.rel (%p485) target = $region72
        $region71: #{tpu_custom_call.1} parent=63 // pred_region
          %p488 = scmp.lt.s32.totalorder %s30, 1
          %s489 = scalar_select %p488, %s30, 1
          %s490 = smul.addr %s489, 2
          %s491 = smul.addr %s490, 8
          %s492 = scalar_lea.vmem %s1, %s491
        $region72: #{tpu_custom_call.1} parent=63 // pred_fallthru
          _
      $region64: #{tpu_custom_call.1} parent=5 // pred_fallthru
        _
      %p493 = scmp.le.s32.totalorder 1, %s30
      %p494 = scmp.lt.s32.totalorder %s30, 3
      %p495 = pnand %p493, %p494
      %p496 = pneg %p495
      // Predicated region
      $region73: #{tpu_custom_call.1} parent=5 // pred_check
        _
      $region74: #{tpu_custom_call.1} parent=5 // pred_check_branch
        %498 = sbr.rel (%p495) target = $region76
      $region75: #{tpu_custom_call.1} parent=5 // pred_region
        %s499 = ssub.s32 %s30, 1
        // Predicated region
        $region77: #{tpu_custom_call.1} parent=75 // pred_check
          %p500 = pneg %p229
        $region78: #{tpu_custom_call.1} parent=75 // pred_check_branch
          %502 = sbr.rel (%p500) target = $region80
        $region79: #{tpu_custom_call.1} parent=75 // pred_region
          %503 = dma.done [#allocation3], 512
        $region80: #{tpu_custom_call.1} parent=75 // pred_fallthru
          _
        %p504 = scmp.lt.s32.totalorder %s35, 1
        %s505 = scalar_select %p504, %s35, 1
        %s506 = smul.addr %s505, 2
        %s507 = smul.addr %s506, 8
        %s508 = scalar_lea.vmem %s0, %s507
        %p509 = pneg %p56
        %p510 = pneg %p53
        %p511 = scmp.lt.s32.totalorder %s35, 1
        %s512 = scalar_select %p511, %s35, 1
        %s513 = smul.addr %s512, 2
        %s514 = smul.addr %s513, 8
        %s515 = scalar_lea.vmem %s1, %s514
        %p516 = pneg %p82
        %p517 = pneg %p79
        %p518 = pneg %p103
        %p519 = pneg %p100
        %p520 = pneg %p124
        %p521 = pneg %p121
        %p522 = pneg %p145
        %p523 = pneg %p142
        %p524 = pneg %p166
        %p525 = pneg %p163
        %p526 = pneg %p187
        %p527 = pneg %p184
        %p528 = pneg %p208
        %p529 = pneg %p205
        %p530 = pneg %p229
        %p531 = pneg %p226
        %p532 = pneg %p250
        %p533 = pneg %p247
        %p534 = pneg %p271
        %p535 = pneg %p268
        %p536 = pneg %p292
        %p537 = pneg %p289
        %p538 = pneg %p313
        %p539 = pneg %p310
        %p540 = pneg %p334
        %p541 = pneg %p331
        %p542 = pneg %p360
        %p543 = pneg %p357
        %s544 = sand.u32 %s347, 1
        %s545 = scalar_lea.sflag [#allocation4], %s544
        %s546 = sand.u32 %s347, 1
        %s547 = smul.addr %s546, 16
        %s548 = scalar_lea.vmem [#allocation5], %s547
        %p549 = pneg %p386
        %p550 = pneg %p383
        %s551 = sand.u32 %s35, 1
        %s552 = scalar_lea.sflag [#allocation7], %s551
        %s553 = sand.u32 %s373, 1
        %s554 = smul.addr %s553, 16
        %s555 = scalar_lea.vmem [#allocation6], %s554
        %p556 = pneg %p412
        %p557 = pneg %p409
        %s558 = sand.u32 %s35, 1
        %s559 = scalar_lea.sflag [#allocation7], %s558
        %s560 = sand.u32 %s399, 1
        %s561 = smul.addr %s560, 2
        %s562 = scalar_lea.vmem [#allocation8], %s561
        %p563 = scmp.lt.s32.totalorder %s35, 1
        %s564 = scalar_select %p563, %s35, 1
        %s565 = smul.addr %s564, 2
        %s566 = smul.addr %s565, 8
        %s567 = scalar_lea.vmem %s0, %s566
        %p568 = scmp.lt.s32.totalorder %s35, 1
        %s569 = scalar_select %p568, %s35, 1
        %s570 = smul.addr %s569, 2
        %s571 = smul.addr %s570, 8
        %s572 = scalar_lea.vmem %s1, %s571
        %v573 = vld [vmem:[%s567] sm:$0xff]
        %v574 = vld [vmem:[%s567 + $0x8] sm:$0xff]
        %v575 = vld [vmem:[%s2] sm:$0xff]
        %v576 = vld [vmem:[%s2 + $0x8] sm:$0xff]
        %v577 = vld [vmem:[%s2 + $0x10] sm:$0xff]
        %v578 = vld [vmem:[%s2 + $0x18] sm:$0xff]
        %v579 = vld [vmem:[%s2 + $0x20] sm:$0xff]
        %v580 = vld [vmem:[%s2 + $0x28] sm:$0xff]
        %v581 = vld [vmem:[%s2 + $0x30] sm:$0xff]
        %v582 = vld [vmem:[%s2 + $0x38] sm:$0xff]
        %v583 = vld [vmem:[%s2 + $0x40] sm:$0xff]
        %v584 = vld [vmem:[%s2 + $0x48] sm:$0xff]
        %v585 = vld [vmem:[%s2 + $0x50] sm:$0xff]
        %v586 = vld [vmem:[%s2 + $0x58] sm:$0xff]
        %v587 = vld [vmem:[%s2 + $0x60] sm:$0xff]
        %v588 = vld [vmem:[%s2 + $0x68] sm:$0xff]
        %v589 = vld [vmem:[%s2 + $0x70] sm:$0xff]
        %v590 = vld [vmem:[%s2 + $0x78] sm:$0xff]
        %v591 = vld [vmem:[%s3] sm:$0x1]
        %v593 = vlaneseq
        %v594 = vshrl.u32 %v593, 7
        %v595 = vsub.s32 0, %v594
        %v596 = vrot.slane %v591, %v595
        %598 = vmatprep.subr.mxu0 0.0
        %599 = vmatpush1.msra.mxu0 %v590
        %600 = vmatprep.subr.mxu0 0.0
        %601 = vmatpush1.msra.mxu0 %v589
        %602 = vmatprep.subr.mxu0 0.0
        %603 = vmatpush1.msra.mxu0 %v588
        %604 = vmatprep.subr.mxu0 0.0
        %605 = vmatpush1.msra.mxu0 %v587
        %606 = vmatprep.subr.mxu0 0.0
        %607 = vmatpush1.msra.mxu0 %v586
        %608 = vmatprep.subr.mxu0 0.0
        %609 = vmatpush1.msra.mxu0 %v585
        %610 = vmatprep.subr.mxu0 0.0
        %611 = vmatpush1.msra.mxu0 %v584
        %612 = vmatprep.subr.mxu0 0.0
        %613 = vmatpush1.msra.mxu0 %v583
        %614 = vmatprep.subr.mxu0 0.0
        %615 = vmatpush1.msra.mxu0 %v582
        %616 = vmatprep.subr.mxu0 0.0
        %617 = vmatpush1.msra.mxu0 %v581
        %618 = vmatprep.subr.mxu0 0.0
        %619 = vmatpush1.msra.mxu0 %v580
        %620 = vmatprep.subr.mxu0 0.0
        %621 = vmatpush1.msra.mxu0 %v579
        %622 = vmatprep.subr.mxu0 0.0
        %623 = vmatpush1.msra.mxu0 %v578
        %624 = vmatprep.subr.mxu0 0.0
        %625 = vmatpush1.msra.mxu0 %v577
        %626 = vmatprep.subr.mxu0 0.0
        %627 = vmatpush1.msra.mxu0 %v576
        %628 = vmatprep.subr.mxu0 0.0
        %629 = vmatpush1.msra.mxu0 %v575
        %630 = vmatprep.subr.mxu0 0.0
        %631 = vmatpush2.msra.mxu0 0.0
        %632 = vmatprep.subr.mxu0 0.0
        %633 = vmatpush2.msra.mxu0 0.0
        %634 = vmatprep.subr.mxu0 0.0
        %635 = vmatpush2.msra.mxu0 0.0
        %636 = vmatprep.subr.mxu0 0.0
        %637 = vmatpush2.msra.mxu0 0.0
        %638 = vmatprep.subr.mxu0 0.0
        %639 = vmatpush2.msra.mxu0 0.0
        %640 = vmatprep.subr.mxu0 0.0
        %641 = vmatpush2.msra.mxu0 0.0
        %642 = vmatprep.subr.mxu0 0.0
        %643 = vmatpush2.msra.mxu0 0.0
        %644 = vmatprep.subr.mxu0 0.0
        %645 = vmatpush2.msra.mxu0 0.0
        %646 = vmatprep.subr.mxu0 0.0
        %647 = vmatpush2.msra.mxu0 0.0
        %648 = vmatprep.subr.mxu0 0.0
        %649 = vmatpush2.msra.mxu0 0.0
        %650 = vmatprep.subr.mxu0 0.0
        %651 = vmatpush2.msra.mxu0 0.0
        %652 = vmatprep.subr.mxu0 0.0
        %653 = vmatpush2.msra.mxu0 0.0
        %654 = vmatprep.subr.mxu0 0.0
        %655 = vmatpush2.msra.mxu0 0.0
        %656 = vmatprep.subr.mxu0 0.0
        %657 = vmatpush2.msra.mxu0 0.0
        %658 = vmatprep.subr.mxu0 0.0
        %659 = vmatpush2.msra.mxu0 0.0
        %660 = vmatprep.subr.mxu0 0.0
        %661 = vmatpush2.msra.mxu0 0.0
        %662 = vmatprep.mubr.f32.mxu0 0.0
        %663 = vmatmul.mubr.f32.gmra.mxu0 %v573
        %v664 = vpop.f32.mrf.mxu0
        %v665 = vadd.f32 %v596, %v664
        %v666 = vpop.f32.mrf.mxu0
        %667 = vmatprep.mubr.f32.mxu0 0.0
        %668 = vmatmul.mubr.f32.gmra.mxu0 %v574
        %v669 = vpop.f32.mrf.mxu0
        %v670 = vadd.f32 %v596, %v669
        %v671 = vpop.f32.mrf.mxu0
        %672 = vdwg.mxu0
        %v673 = vmax.f32 %v665, 0.0
        %v674 = vmax.f32 %v670, 0.0
        %v675 = vld [vmem:[%s572] sm:$0xff]
        %v676 = vld [vmem:[%s572 + $0x8] sm:$0xff]
        %v677 = vld [vmem:[%s4] sm:$0xff]
        %v678 = vld [vmem:[%s4 + $0x8] sm:$0xff]
        %v679 = vld [vmem:[%s4 + $0x10] sm:$0xff]
        %v680 = vld [vmem:[%s4 + $0x18] sm:$0xff]
        %v681 = vld [vmem:[%s4 + $0x20] sm:$0xff]
        %v682 = vld [vmem:[%s4 + $0x28] sm:$0xff]
        %v683 = vld [vmem:[%s4 + $0x30] sm:$0xff]
        %v684 = vld [vmem:[%s4 + $0x38] sm:$0xff]
        %v685 = vld [vmem:[%s4 + $0x40] sm:$0xff]
        %v686 = vld [vmem:[%s4 + $0x48] sm:$0xff]
        %v687 = vld [vmem:[%s4 + $0x50] sm:$0xff]
        %v688 = vld [vmem:[%s4 + $0x58] sm:$0xff]
        %v689 = vld [vmem:[%s4 + $0x60] sm:$0xff]
        %v690 = vld [vmem:[%s4 + $0x68] sm:$0xff]
        %v691 = vld [vmem:[%s4 + $0x70] sm:$0xff]
        %v692 = vld [vmem:[%s4 + $0x78] sm:$0xff]
        %v693 = vld [vmem:[%s5] sm:$0x1]
        %v695 = vlaneseq
        %v696 = vshrl.u32 %v695, 7
        %v697 = vsub.s32 0, %v696
        %v698 = vrot.slane %v693, %v697
        %700 = vmatprep.subr.mxu0 0.0
        %701 = vmatpush1.msra.mxu0 %v692
        %702 = vmatprep.subr.mxu0 0.0
        %703 = vmatpush1.msra.mxu0 %v691
        %704 = vmatprep.subr.mxu0 0.0
        %705 = vmatpush1.msra.mxu0 %v690
        %706 = vmatprep.subr.mxu0 0.0
        %707 = vmatpush1.msra.mxu0 %v689
        %708 = vmatprep.subr.mxu0 0.0
        %709 = vmatpush1.msra.mxu0 %v688
        %710 = vmatprep.subr.mxu0 0.0
        %711 = vmatpush1.msra.mxu0 %v687
        %712 = vmatprep.subr.mxu0 0.0
        %713 = vmatpush1.msra.mxu0 %v686
        %714 = vmatprep.subr.mxu0 0.0
        %715 = vmatpush1.msra.mxu0 %v685
        %716 = vmatprep.subr.mxu0 0.0
        %717 = vmatpush1.msra.mxu0 %v684
        %718 = vmatprep.subr.mxu0 0.0
        %719 = vmatpush1.msra.mxu0 %v683
        %720 = vmatprep.subr.mxu0 0.0
        %721 = vmatpush1.msra.mxu0 %v682
        %722 = vmatprep.subr.mxu0 0.0
        %723 = vmatpush1.msra.mxu0 %v681
        %724 = vmatprep.subr.mxu0 0.0
        %725 = vmatpush1.msra.mxu0 %v680
        %726 = vmatprep.subr.mxu0 0.0
        %727 = vmatpush1.msra.mxu0 %v679
        %728 = vmatprep.subr.mxu0 0.0
        %729 = vmatpush1.msra.mxu0 %v678
        %730 = vmatprep.subr.mxu0 0.0
        %731 = vmatpush1.msra.mxu0 %v677
        %732 = vmatprep.subr.mxu0 0.0
        %733 = vmatpush2.msra.mxu0 0.0
        %734 = vmatprep.subr.mxu0 0.0
        %735 = vmatpush2.msra.mxu0 0.0
        %736 = vmatprep.subr.mxu0 0.0
        %737 = vmatpush2.msra.mxu0 0.0
        %738 = vmatprep.subr.mxu0 0.0
        %739 = vmatpush2.msra.mxu0 0.0
        %740 = vmatprep.subr.mxu0 0.0
        %741 = vmatpush2.msra.mxu0 0.0
        %742 = vmatprep.subr.mxu0 0.0
        %743 = vmatpush2.msra.mxu0 0.0
        %744 = vmatprep.subr.mxu0 0.0
        %745 = vmatpush2.msra.mxu0 0.0
        %746 = vmatprep.subr.mxu0 0.0
        %747 = vmatpush2.msra.mxu0 0.0
        %748 = vmatprep.subr.mxu0 0.0
        %749 = vmatpush2.msra.mxu0 0.0
        %750 = vmatprep.subr.mxu0 0.0
        %751 = vmatpush2.msra.mxu0 0.0
        %752 = vmatprep.subr.mxu0 0.0
        %753 = vmatpush2.msra.mxu0 0.0
        %754 = vmatprep.subr.mxu0 0.0
        %755 = vmatpush2.msra.mxu0 0.0
        %756 = vmatprep.subr.mxu0 0.0
        %757 = vmatpush2.msra.mxu0 0.0
        %758 = vmatprep.subr.mxu0 0.0
        %759 = vmatpush2.msra.mxu0 0.0
        %760 = vmatprep.subr.mxu0 0.0
        %761 = vmatpush2.msra.mxu0 0.0
        %762 = vmatprep.subr.mxu0 0.0
        %763 = vmatpush2.msra.mxu0 0.0
        %764 = vmatprep.mubr.f32.mxu0 0.0
        %765 = vmatmul.mubr.f32.gmra.mxu0 %v675
        %v766 = vpop.f32.mrf.mxu0
        %v767 = vadd.f32 %v698, %v766
        %v768 = vpop.f32.mrf.mxu0
        %769 = vmatprep.mubr.f32.mxu0 0.0
        %770 = vmatmul.mubr.f32.gmra.mxu0 %v676
        %v771 = vpop.f32.mrf.mxu0
        %v772 = vadd.f32 %v698, %v771
        %v773 = vpop.f32.mrf.mxu0
        %774 = vdwg.mxu0
        %v775 = vmax.f32 %v767, 0.0
        %v776 = vmax.f32 %v772, 0.0
        %779 = vrot.lane.b32.xlu0 %v775, 64
        %v780 = vpop.permute.xlu0 %779
        %781 = vrot.lane.b32.xlu0 %v776, 64
        %v782 = vpop.permute.xlu0 %781
        %vm785 = vcmask 523264
        %v786 = vsel %vm785, %v673, %v780
        %v787 = vsel %vm785, %v674, %v782
        %v788 = vadd.f32 %v786, %v787
        %v789 = vrot.slane %v788, 4
        %v790 = vadd.f32 %v788, %v789
        %v791 = vrot.slane %v790, 2
        %v792 = vadd.f32 %v790, %v791
        %v793 = vrot.slane %v792, 1
        %v794 = vadd.f32 %v792, %v793
        %v795 = vrcp.pop 16.0
        %v796 = vmul.f32 %v794, %v795
        %v797 = vld [vmem:[%s6] sm:$0xff]
        %v798 = vld [vmem:[%s6 + $0x8] sm:$0xff]
        %v799 = vld [vmem:[%s6 + $0x10] sm:$0xff]
        %v800 = vld [vmem:[%s6 + $0x18] sm:$0xff]
        %v801 = vld [vmem:[%s6 + $0x20] sm:$0xff]
        %v802 = vld [vmem:[%s6 + $0x28] sm:$0xff]
        %v803 = vld [vmem:[%s6 + $0x30] sm:$0xff]
        %v804 = vld [vmem:[%s6 + $0x38] sm:$0xff]
        %v805 = vld [vmem:[%s6 + $0x40] sm:$0xff]
        %v806 = vld [vmem:[%s6 + $0x48] sm:$0xff]
        %v807 = vld [vmem:[%s6 + $0x50] sm:$0xff]
        %v808 = vld [vmem:[%s6 + $0x58] sm:$0xff]
        %v809 = vld [vmem:[%s6 + $0x60] sm:$0xff]
        %v810 = vld [vmem:[%s6 + $0x68] sm:$0xff]
        %v811 = vld [vmem:[%s6 + $0x70] sm:$0xff]
        %v812 = vld [vmem:[%s6 + $0x78] sm:$0xff]
        %v813 = vld [vmem:[%s7] sm:$0x1]
        %814 = vmatprep.subr.mxu0 0.0
        %815 = vmatpush1.msra.mxu0 %v812
        %816 = vmatprep.subr.mxu0 0.0
        %817 = vmatpush1.msra.mxu0 %v811
        %818 = vmatprep.subr.mxu0 0.0
        %819 = vmatpush1.msra.mxu0 %v810
        %820 = vmatprep.subr.mxu0 0.0
        %821 = vmatpush1.msra.mxu0 %v809
        %822 = vmatprep.subr.mxu0 0.0
        %823 = vmatpush1.msra.mxu0 %v808
        %824 = vmatprep.subr.mxu0 0.0
        %825 = vmatpush1.msra.mxu0 %v807
        %826 = vmatprep.subr.mxu0 0.0
        %827 = vmatpush1.msra.mxu0 %v806
        %828 = vmatprep.subr.mxu0 0.0
        %829 = vmatpush1.msra.mxu0 %v805
        %830 = vmatprep.subr.mxu0 0.0
        %831 = vmatpush1.msra.mxu0 %v804
        %832 = vmatprep.subr.mxu0 0.0
        %833 = vmatpush1.msra.mxu0 %v803
        %834 = vmatprep.subr.mxu0 0.0
        %835 = vmatpush1.msra.mxu0 %v802
        %836 = vmatprep.subr.mxu0 0.0
        %837 = vmatpush1.msra.mxu0 %v801
        %838 = vmatprep.subr.mxu0 0.0
        %839 = vmatpush1.msra.mxu0 %v800
        %840 = vmatprep.subr.mxu0 0.0
        %841 = vmatpush1.msra.mxu0 %v799
        %842 = vmatprep.subr.mxu0 0.0
        %843 = vmatpush1.msra.mxu0 %v798
        %844 = vmatprep.subr.mxu0 0.0
        %845 = vmatpush1.msra.mxu0 %v797
        %846 = vmatprep.subr.mxu0 0.0
        %847 = vmatpush2.msra.mxu0 0.0
        %848 = vmatprep.subr.mxu0 0.0
        %849 = vmatpush2.msra.mxu0 0.0
        %850 = vmatprep.subr.mxu0 0.0
        %851 = vmatpush2.msra.mxu0 0.0
        %852 = vmatprep.subr.mxu0 0.0
        %853 = vmatpush2.msra.mxu0 0.0
        %854 = vmatprep.subr.mxu0 0.0
        %855 = vmatpush2.msra.mxu0 0.0
        %856 = vmatprep.subr.mxu0 0.0
        %857 = vmatpush2.msra.mxu0 0.0
        %858 = vmatprep.subr.mxu0 0.0
        %859 = vmatpush2.msra.mxu0 0.0
        %860 = vmatprep.subr.mxu0 0.0
        %861 = vmatpush2.msra.mxu0 0.0
        %862 = vmatprep.subr.mxu0 0.0
        %863 = vmatpush2.msra.mxu0 0.0
        %864 = vmatprep.subr.mxu0 0.0
        %865 = vmatpush2.msra.mxu0 0.0
        %866 = vmatprep.subr.mxu0 0.0
        %867 = vmatpush2.msra.mxu0 0.0
        %868 = vmatprep.subr.mxu0 0.0
        %869 = vmatpush2.msra.mxu0 0.0
        %870 = vmatprep.subr.mxu0 0.0
        %871 = vmatpush2.msra.mxu0 0.0
        %872 = vmatprep.subr.mxu0 0.0
        %873 = vmatpush2.msra.mxu0 0.0
        %874 = vmatprep.subr.mxu0 0.0
        %875 = vmatpush2.msra.mxu0 0.0
        %876 = vmatprep.subr.mxu0 0.0
        %877 = vmatpush2.msra.mxu0 0.0
        %878 = vmatprep.mubr.f32.mxu0 0.0
        %879 = vmatmul.mubr.f32.gmra.mxu0 %v796
        %v880 = vpop.f32.mrf.mxu0
        %v881 = vadd.f32 %v813, %v880
        %v882 = vpop.f32.mrf.mxu0
        %883 = vdwg.mxu0
        %v884 = vmax.f32 %v881, 0.0
        %v885 = vld [vmem:[#allocation2] sm:$0xff]
        %v886 = vld [vmem:[#allocation2 + $0x8] sm:$0xff]
        %v887 = vld [vmem:[#allocation2 + $0x10] sm:$0xff]
        %v888 = vld [vmem:[#allocation2 + $0x18] sm:$0xff]
        %v889 = vld [vmem:[%s9] sm:$0x1]
        %vm890 = vcmask 261120
        %v892 = vsel %vm890, %v884, 0
        %894 = vmatprep.subr.mxu0 0.0
        %895 = vmatpush1.msra.mxu0 0.0
        %896 = vmatprep.subr.mxu0 0.0
        %897 = vmatpush1.msra.mxu0 0.0
        %898 = vmatprep.subr.mxu0 0.0
        %899 = vmatpush1.msra.mxu0 0.0
        %900 = vmatprep.subr.mxu0 0.0
        %901 = vmatpush1.msra.mxu0 0.0
        %902 = vmatprep.subr.mxu0 0.0
        %903 = vmatpush1.msra.mxu0 0.0
        %904 = vmatprep.subr.mxu0 0.0
        %905 = vmatpush1.msra.mxu0 0.0
        %906 = vmatprep.subr.mxu0 0.0
        %907 = vmatpush1.msra.mxu0 0.0
        %908 = vmatprep.subr.mxu0 0.0
        %909 = vmatpush1.msra.mxu0 0.0
        %910 = vmatprep.subr.mxu0 0.0
        %911 = vmatpush1.msra.mxu0 0.0
        %912 = vmatprep.subr.mxu0 0.0
        %913 = vmatpush1.msra.mxu0 0.0
        %914 = vmatprep.subr.mxu0 0.0
        %915 = vmatpush1.msra.mxu0 0.0
        %916 = vmatprep.subr.mxu0 0.0
        %917 = vmatpush1.msra.mxu0 0.0
        %918 = vmatprep.subr.mxu0 0.0
        %919 = vmatpush1.msra.mxu0 %v888
        %920 = vmatprep.subr.mxu0 0.0
        %921 = vmatpush1.msra.mxu0 %v887
        %922 = vmatprep.subr.mxu0 0.0
        %923 = vmatpush1.msra.mxu0 %v886
        %924 = vmatprep.subr.mxu0 0.0
        %925 = vmatpush1.msra.mxu0 %v885
        %926 = vmatprep.subr.mxu0 0.0
        %927 = vmatpush2.msra.mxu0 0.0
        %928 = vmatprep.subr.mxu0 0.0
        %929 = vmatpush2.msra.mxu0 0.0
        %930 = vmatprep.subr.mxu0 0.0
        %931 = vmatpush2.msra.mxu0 0.0
        %932 = vmatprep.subr.mxu0 0.0
        %933 = vmatpush2.msra.mxu0 0.0
        %934 = vmatprep.subr.mxu0 0.0
        %935 = vmatpush2.msra.mxu0 0.0
        %936 = vmatprep.subr.mxu0 0.0
        %937 = vmatpush2.msra.mxu0 0.0
        %938 = vmatprep.subr.mxu0 0.0
        %939 = vmatpush2.msra.mxu0 0.0
        %940 = vmatprep.subr.mxu0 0.0
        %941 = vmatpush2.msra.mxu0 0.0
        %942 = vmatprep.subr.mxu0 0.0
        %943 = vmatpush2.msra.mxu0 0.0
        %944 = vmatprep.subr.mxu0 0.0
        %945 = vmatpush2.msra.mxu0 0.0
        %946 = vmatprep.subr.mxu0 0.0
        %947 = vmatpush2.msra.mxu0 0.0
        %948 = vmatprep.subr.mxu0 0.0
        %949 = vmatpush2.msra.mxu0 0.0
        %950 = vmatprep.subr.mxu0 0.0
        %951 = vmatpush2.msra.mxu0 0.0
        %952 = vmatprep.subr.mxu0 0.0
        %953 = vmatpush2.msra.mxu0 0.0
        %954 = vmatprep.subr.mxu0 0.0
        %955 = vmatpush2.msra.mxu0 0.0
        %956 = vmatprep.subr.mxu0 0.0
        %957 = vmatpush2.msra.mxu0 0.0
        %958 = vmatprep.mubr.f32.mxu0 0.0
        %959 = vmatmul.mubr.f32.gmra.mxu0 %v892
        %v960 = vpop.f32.mrf.mxu0
        %v961 = vadd.f32 %v889, %v960
        %v962 = vpop.f32.mrf.mxu0
        %963 = vdwg.mxu0
        %v964 = vxor.u32 %v961, 2147483648
        %v965 = vmul.f32 %v964, 1.442695
        %v966 = vpow.pop %v965
        %v967 = vadd.f32 %v966, 1.0
        %v968 = vrcp.pop %v967
        %v969 = vmul.f32 1.0, %v968
        %v970 = vlaneseq
        %v971 = vshrl.u32 %v970, 7
        %v972 = vsub.s32 0, %v971
        %v973 = vrot.slane %v969, %v972
        %v974 = vmul.f32 %v786, %v973
        %v975 = vmul.f32 %v787, %v973
        %976 = vst [vmem:[%s548] sm:$0xff] %v974
        %977 = vst [vmem:[%s548 + $0x8] sm:$0xff] %v975
        %v978 = vld [vmem:[%s10] sm:$0xff]
        %v979 = vld [vmem:[%s10 + $0x8] sm:$0xff]
        %v980 = vld [vmem:[%s10 + $0x10] sm:$0xff]
        %v981 = vld [vmem:[%s10 + $0x18] sm:$0xff]
        %v982 = vld [vmem:[%s10 + $0x20] sm:$0xff]
        %v983 = vld [vmem:[%s10 + $0x28] sm:$0xff]
        %v984 = vld [vmem:[%s10 + $0x30] sm:$0xff]
        %v985 = vld [vmem:[%s10 + $0x38] sm:$0xff]
        %v986 = vld [vmem:[%s10 + $0x40] sm:$0xff]
        %v987 = vld [vmem:[%s10 + $0x48] sm:$0xff]
        %v988 = vld [vmem:[%s10 + $0x50] sm:$0xff]
        %v989 = vld [vmem:[%s10 + $0x58] sm:$0xff]
        %v990 = vld [vmem:[%s10 + $0x60] sm:$0xff]
        %v991 = vld [vmem:[%s10 + $0x68] sm:$0xff]
        %v992 = vld [vmem:[%s10 + $0x70] sm:$0xff]
        %v993 = vld [vmem:[%s10 + $0x78] sm:$0xff]
        %v994 = vld [vmem:[%s11] sm:$0x1]
        %v996 = vlaneseq
        %v997 = vshrl.u32 %v996, 7
        %v998 = vsub.s32 0, %v997
        %v999 = vrot.slane %v994, %v998
        %1001 = vmatprep.subr.mxu0 0.0
        %1002 = vmatpush1.msra.mxu0 %v993
        %1003 = vmatprep.subr.mxu0 0.0
        %1004 = vmatpush1.msra.mxu0 %v992
        %1005 = vmatprep.subr.mxu0 0.0
        %1006 = vmatpush1.msra.mxu0 %v991
        %1007 = vmatprep.subr.mxu0 0.0
        %1008 = vmatpush1.msra.mxu0 %v990
        %1009 = vmatprep.subr.mxu0 0.0
        %1010 = vmatpush1.msra.mxu0 %v989
        %1011 = vmatprep.subr.mxu0 0.0
        %1012 = vmatpush1.msra.mxu0 %v988
        %1013 = vmatprep.subr.mxu0 0.0
        %1014 = vmatpush1.msra.mxu0 %v987
        %1015 = vmatprep.subr.mxu0 0.0
        %1016 = vmatpush1.msra.mxu0 %v986
        %1017 = vmatprep.subr.mxu0 0.0
        %1018 = vmatpush1.msra.mxu0 %v985
        %1019 = vmatprep.subr.mxu0 0.0
        %1020 = vmatpush1.msra.mxu0 %v984
        %1021 = vmatprep.subr.mxu0 0.0
        %1022 = vmatpush1.msra.mxu0 %v983
        %1023 = vmatprep.subr.mxu0 0.0
        %1024 = vmatpush1.msra.mxu0 %v982
        %1025 = vmatprep.subr.mxu0 0.0
        %1026 = vmatpush1.msra.mxu0 %v981
        %1027 = vmatprep.subr.mxu0 0.0
        %1028 = vmatpush1.msra.mxu0 %v980
        %1029 = vmatprep.subr.mxu0 0.0
        %1030 = vmatpush1.msra.mxu0 %v979
        %1031 = vmatprep.subr.mxu0 0.0
        %1032 = vmatpush1.msra.mxu0 %v978
        %1033 = vmatprep.subr.mxu0 0.0
        %1034 = vmatpush2.msra.mxu0 0.0
        %1035 = vmatprep.subr.mxu0 0.0
        %1036 = vmatpush2.msra.mxu0 0.0
        %1037 = vmatprep.subr.mxu0 0.0
        %1038 = vmatpush2.msra.mxu0 0.0
        %1039 = vmatprep.subr.mxu0 0.0
        %1040 = vmatpush2.msra.mxu0 0.0
        %1041 = vmatprep.subr.mxu0 0.0
        %1042 = vmatpush2.msra.mxu0 0.0
        %1043 = vmatprep.subr.mxu0 0.0
        %1044 = vmatpush2.msra.mxu0 0.0
        %1045 = vmatprep.subr.mxu0 0.0
        %1046 = vmatpush2.msra.mxu0 0.0
        %1047 = vmatprep.subr.mxu0 0.0
        %1048 = vmatpush2.msra.mxu0 0.0
        %1049 = vmatprep.subr.mxu0 0.0
        %1050 = vmatpush2.msra.mxu0 0.0
        %1051 = vmatprep.subr.mxu0 0.0
        %1052 = vmatpush2.msra.mxu0 0.0
        %1053 = vmatprep.subr.mxu0 0.0
        %1054 = vmatpush2.msra.mxu0 0.0
        %1055 = vmatprep.subr.mxu0 0.0
        %1056 = vmatpush2.msra.mxu0 0.0
        %1057 = vmatprep.subr.mxu0 0.0
        %1058 = vmatpush2.msra.mxu0 0.0
        %1059 = vmatprep.subr.mxu0 0.0
        %1060 = vmatpush2.msra.mxu0 0.0
        %1061 = vmatprep.subr.mxu0 0.0
        %1062 = vmatpush2.msra.mxu0 0.0
        %1063 = vmatprep.subr.mxu0 0.0
        %1064 = vmatpush2.msra.mxu0 0.0
        %1065 = vmatprep.mubr.f32.mxu0 0.0
        %1066 = vmatmul.mubr.f32.gmra.mxu0 %v974
        %v1067 = vpop.f32.mrf.mxu0
        %v1068 = vadd.f32 %v999, %v1067
        %v1069 = vpop.f32.mrf.mxu0
        %1070 = vmatprep.mubr.f32.mxu0 0.0
        %1071 = vmatmul.mubr.f32.gmra.mxu0 %v975
        %v1072 = vpop.f32.mrf.mxu0
        %v1073 = vadd.f32 %v999, %v1072
        %v1074 = vpop.f32.mrf.mxu0
        %1075 = vdwg.mxu0
        %1076 = vst [vmem:[%s555] sm:$0xff] %v1068
        %1077 = vst [vmem:[%s555 + $0x8] sm:$0xff] %v1073
        %v1078 = vadd.f32 %v974, %v975
        %v1079 = vrot.slane %v1078, 4
        %v1080 = vadd.f32 %v1078, %v1079
        %v1081 = vrot.slane %v1080, 2
        %v1082 = vadd.f32 %v1080, %v1081
        %v1083 = vrot.slane %v1082, 1
        %v1084 = vadd.f32 %v1082, %v1083
        %v1085 = vmul.f32 %v1084, %v795
        %v1086 = vld [vmem:[%s12] sm:$0xff]
        %v1087 = vld [vmem:[%s12 + $0x8] sm:$0xff]
        %v1088 = vld [vmem:[%s12 + $0x10] sm:$0xff]
        %v1089 = vld [vmem:[%s12 + $0x18] sm:$0xff]
        %v1090 = vld [vmem:[%s12 + $0x20] sm:$0xff]
        %v1091 = vld [vmem:[%s12 + $0x28] sm:$0xff]
        %v1092 = vld [vmem:[%s12 + $0x30] sm:$0xff]
        %v1093 = vld [vmem:[%s12 + $0x38] sm:$0xff]
        %v1094 = vld [vmem:[%s12 + $0x40] sm:$0xff]
        %v1095 = vld [vmem:[%s12 + $0x48] sm:$0xff]
        %v1096 = vld [vmem:[%s12 + $0x50] sm:$0xff]
        %v1097 = vld [vmem:[%s12 + $0x58] sm:$0xff]
        %v1098 = vld [vmem:[%s12 + $0x60] sm:$0xff]
        %v1099 = vld [vmem:[%s12 + $0x68] sm:$0xff]
        %v1100 = vld [vmem:[%s12 + $0x70] sm:$0xff]
        %v1101 = vld [vmem:[%s12 + $0x78] sm:$0xff]
        %v1102 = vld [vmem:[%s12 + $0x80] sm:$0xff]
        %v1103 = vld [vmem:[%s12 + $0x88] sm:$0xff]
        %v1104 = vld [vmem:[%s12 + $0x90] sm:$0xff]
        %v1105 = vld [vmem:[%s12 + $0x98] sm:$0xff]
        %v1106 = vld [vmem:[%s12 + $0xa0] sm:$0xff]
        %v1107 = vld [vmem:[%s12 + $0xa8] sm:$0xff]
        %v1108 = vld [vmem:[%s12 + $0xb0] sm:$0xff]
        %v1109 = vld [vmem:[%s12 + $0xb8] sm:$0xff]
        %v1110 = vld [vmem:[%s12 + $0xc0] sm:$0xff]
        %v1111 = vld [vmem:[%s12 + $0xc8] sm:$0xff]
        %v1112 = vld [vmem:[%s12 + $0xd0] sm:$0xff]
        %v1113 = vld [vmem:[%s12 + $0xd8] sm:$0xff]
        %v1114 = vld [vmem:[%s12 + $0xe0] sm:$0xff]
        %v1115 = vld [vmem:[%s12 + $0xe8] sm:$0xff]
        %v1116 = vld [vmem:[%s12 + $0xf0] sm:$0xff]
        %v1117 = vld [vmem:[%s12 + $0xf8] sm:$0xff]
        %v1118 = vld [vmem:[%s13] sm:$0x3]
        %v1120 = vlaneseq
        %v1121 = vshrl.u32 %v1120, 7
        %v1122 = vsub.s32 0, %v1121
        %v1123 = vrot.slane %v1118, %v1122
        %v1124 = vlaneseq
        %v1125 = vshrl.u32 %v1124, 7
        %v1126 = vsub.s32 1, %v1125
        %v1127 = vrot.slane %v1118, %v1126
        %1130 = vmatprep.subr.mxu0 %v1117
        %1131 = vmatpush1.msra.mxu0 %v1116
        %1132 = vmatprep.subr.mxu0 %v1115
        %1133 = vmatpush1.msra.mxu0 %v1114
        %1134 = vmatprep.subr.mxu0 %v1113
        %1135 = vmatpush1.msra.mxu0 %v1112
        %1136 = vmatprep.subr.mxu0 %v1111
        %1137 = vmatpush1.msra.mxu0 %v1110
        %1138 = vmatprep.subr.mxu0 %v1109
        %1139 = vmatpush1.msra.mxu0 %v1108
        %1140 = vmatprep.subr.mxu0 %v1107
        %1141 = vmatpush1.msra.mxu0 %v1106
        %1142 = vmatprep.subr.mxu0 %v1105
        %1143 = vmatpush1.msra.mxu0 %v1104
        %1144 = vmatprep.subr.mxu0 %v1103
        %1145 = vmatpush1.msra.mxu0 %v1102
        %1146 = vmatprep.subr.mxu0 %v1101
        %1147 = vmatpush1.msra.mxu0 %v1100
        %1148 = vmatprep.subr.mxu0 %v1099
        %1149 = vmatpush1.msra.mxu0 %v1098
        %1150 = vmatprep.subr.mxu0 %v1097
        %1151 = vmatpush1.msra.mxu0 %v1096
        %1152 = vmatprep.subr.mxu0 %v1095
        %1153 = vmatpush1.msra.mxu0 %v1094
        %1154 = vmatprep.subr.mxu0 %v1093
        %1155 = vmatpush1.msra.mxu0 %v1092
        %1156 = vmatprep.subr.mxu0 %v1091
        %1157 = vmatpush1.msra.mxu0 %v1090
        %1158 = vmatprep.subr.mxu0 %v1089
        %1159 = vmatpush1.msra.mxu0 %v1088
        %1160 = vmatprep.subr.mxu0 %v1087
        %1161 = vmatpush1.msra.mxu0 %v1086
        %1162 = vmatprep.subr.mxu0 0.0
        %1163 = vmatpush2.msra.mxu0 0.0
        %1164 = vmatprep.subr.mxu0 0.0
        %1165 = vmatpush2.msra.mxu0 0.0
        %1166 = vmatprep.subr.mxu0 0.0
        %1167 = vmatpush2.msra.mxu0 0.0
        %1168 = vmatprep.subr.mxu0 0.0
        %1169 = vmatpush2.msra.mxu0 0.0
        %1170 = vmatprep.subr.mxu0 0.0
        %1171 = vmatpush2.msra.mxu0 0.0
        %1172 = vmatprep.subr.mxu0 0.0
        %1173 = vmatpush2.msra.mxu0 0.0
        %1174 = vmatprep.subr.mxu0 0.0
        %1175 = vmatpush2.msra.mxu0 0.0
        %1176 = vmatprep.subr.mxu0 0.0
        %1177 = vmatpush2.msra.mxu0 0.0
        %1178 = vmatprep.subr.mxu0 0.0
        %1179 = vmatpush2.msra.mxu0 0.0
        %1180 = vmatprep.subr.mxu0 0.0
        %1181 = vmatpush2.msra.mxu0 0.0
        %1182 = vmatprep.subr.mxu0 0.0
        %1183 = vmatpush2.msra.mxu0 0.0
        %1184 = vmatprep.subr.mxu0 0.0
        %1185 = vmatpush2.msra.mxu0 0.0
        %1186 = vmatprep.subr.mxu0 0.0
        %1187 = vmatpush2.msra.mxu0 0.0
        %1188 = vmatprep.subr.mxu0 0.0
        %1189 = vmatpush2.msra.mxu0 0.0
        %1190 = vmatprep.subr.mxu0 0.0
        %1191 = vmatpush2.msra.mxu0 0.0
        %1192 = vmatprep.subr.mxu0 0.0
        %1193 = vmatpush2.msra.mxu0 0.0
        %1194 = vmatprep.mubr.f32.mxu0 0.0
        %1195 = vmatmul.mubr.f32.gmra.mxu0 %v1085
        %v1196 = vpop.f32.mrf.mxu0
        %v1197 = vadd.f32 %v1123, %v1196
        %v1198 = vpop.f32.mrf.mxu0
        %v1199 = vadd.f32 %v1127, %v1198
        %1200 = vdwg.mxu0
        %v1203 = vcombine.low %v1197, %v1199
        %v1205 = vunpack.c.l.s4 1966171168
        %v1206 = vunpack.c.0.s8 %v1205
        %v1207 = vlaneseq
        %v1208 = vshrl.u32 %v1207, 7
        %v1209 = vsub.s32 %v1206, %v1208
        %v1210 = vrot.slane %v1203, %v1209
        %v1212 = vunpack.c.l.s4 1966171168
        %v1213 = vunpack.c.0.s8 %v1212
        %v1214 = vlaneseq
        %v1215 = vshrl.u32 %v1214, 7
        %v1216 = vsub.s32 %v1213, %v1215
        %v1217 = vrot.slane %v1210, %v1216
        %v1219 = vlaneseq
        %vm1220 = vcmp.ge.s32.totalorder %v1219, 0
        %vm1221 = vcmp.lt.s32.totalorder %v1219, 256
        %vm1222 = vmand %vm1220, %vm1221
        %1223 = vst.msk [vmem:[%s562] sm:$0x3] %vm1222, %v1217
        %s1224 = sand.u32 %s347, 1
        %s1225 = scalar_lea.sflag [#allocation4], %s1224
        %s1226 = sand.u32 %s347, 1
        %s1227 = smul.addr %s1226, 16
        %s1228 = scalar_lea.vmem [#allocation5], %s1227
        %s1229 = sand.u32 %s35, 1
        %s1230 = scalar_lea.sflag [#allocation7], %s1229
        %s1231 = sand.u32 %s373, 1
        %s1232 = smul.addr %s1231, 16
        %s1233 = scalar_lea.vmem [#allocation6], %s1232
        %s1234 = sand.u32 %s35, 1
        %s1235 = scalar_lea.sflag [#allocation7], %s1234
        %s1236 = sand.u32 %s399, 1
        %s1237 = smul.addr %s1236, 2
        %s1238 = scalar_lea.vmem [#allocation8], %s1237
        // Predicated region
        $region81: #{tpu_custom_call.1} parent=75 // pred_check
          %p1239 = pneg %p357
        $region82: #{tpu_custom_call.1} parent=75 // pred_check_branch
          %1241 = sbr.rel (%p1239) target = $region84
        $region83: #{tpu_custom_call.1} parent=75 // pred_region
          %s1243 = ssub.s32 256, 256
          %1244 = vsyncadd %s1225, %s1243
          %s1245 = smul.addr %s35, 2
          %s1246 = smul.addr %s1245, 128
          %s1247 = scalar_lea.hbm %s14, %s1246
          %s1248 = sshll.u32 %s1228, 4
          %s1249 = int_to_ptr.vmem [resolvable:$true] %s1248
          %1254 = dma.vmem_to_hbm [thread:$0]  %s1249, 256, %s1247, %s1225, 128, 128, 8
        $region84: #{tpu_custom_call.1} parent=75 // pred_fallthru
          _
        // Predicated region
        $region85: #{tpu_custom_call.1} parent=75 // pred_check
          %p1255 = pneg %p383
        $region86: #{tpu_custom_call.1} parent=75 // pred_check_branch
          %1257 = sbr.rel (%p1255) target = $region88
        $region87: #{tpu_custom_call.1} parent=75 // pred_region
          %s1259 = ssub.s32 256, 256
          %1260 = vsyncadd %s1230, %s1259
          %s1261 = smul.addr %s35, 2
          %s1262 = smul.addr %s1261, 128
          %s1263 = scalar_lea.hbm %s15, %s1262
          %s1264 = sshll.u32 %s1233, 4
          %s1265 = int_to_ptr.vmem [resolvable:$true] %s1264
          %1270 = dma.vmem_to_hbm [thread:$0]  %s1265, 256, %s1263, %s1230, 128, 128, 8
        $region88: #{tpu_custom_call.1} parent=75 // pred_fallthru
          _
        // Predicated region
        $region89: #{tpu_custom_call.1} parent=75 // pred_check
          %p1271 = pneg %p409
        $region90: #{tpu_custom_call.1} parent=75 // pred_check_branch
          %1273 = sbr.rel (%p1271) target = $region92
        $region91: #{tpu_custom_call.1} parent=75 // pred_region
          %s1275 = ssub.s32 32, 32
          %1276 = vsyncadd %s1235, %s1275
          %s1277 = smul.addr %s35, 2
          %s1278 = smul.addr %s1277, 16
          %s1279 = scalar_lea.hbm %s16, %s1278
          %s1281 = sshll.u32 %s1238, 4
          %s1282 = int_to_ptr.vmem [resolvable:$true] %s1281
          %1284 = dma.vmem_to_hbm [thread:$0]  %s1282, 32, %s1279, %s1235
        $region92: #{tpu_custom_call.1} parent=75 // pred_fallthru
          _
      $region76: #{tpu_custom_call.1} parent=5 // pred_fallthru
        _
      %p1285 = scmp.le.s32.totalorder 2, %s30
      // Predicated region
      $region93: #{tpu_custom_call.1} parent=5 // pred_check
        %p1286 = pneg %p1285
      $region94: #{tpu_custom_call.1} parent=5 // pred_check_branch
        %1288 = sbr.rel (%p1286) target = $region96
      $region95: #{tpu_custom_call.1} parent=5 // pred_region
        %s1289 = ssub.s32 %s30, 2
        // Predicated region
        $region97: #{tpu_custom_call.1} parent=95 // pred_check
          %p1290 = pneg %p363
        $region98: #{tpu_custom_call.1} parent=95 // pred_check_branch
          %1292 = sbr.rel (%p1290) target = $region100
        $region99: #{tpu_custom_call.1} parent=95 // pred_region
          %s1293 = sand.u32 %s348, 1
          %s1294 = scalar_lea.sflag [#allocation4], %s1293
          %s1295 = sand.u32 %s348, 1
          %s1296 = smul.addr %s1295, 16
          %s1297 = scalar_lea.vmem [#allocation5], %s1296
          %1298 = dma.done %s1294, 256
        $region100: #{tpu_custom_call.1} parent=95 // pred_fallthru
          _
        // Predicated region
        $region101: #{tpu_custom_call.1} parent=95 // pred_check
          %p1299 = pneg %p389
        $region102: #{tpu_custom_call.1} parent=95 // pred_check_branch
          %1301 = sbr.rel (%p1299) target = $region104
        $region103: #{tpu_custom_call.1} parent=95 // pred_region
          %s1302 = sand.u32 %s36, 1
          %s1303 = scalar_lea.sflag [#allocation7], %s1302
          %s1304 = sand.u32 %s374, 1
          %s1305 = smul.addr %s1304, 16
          %s1306 = scalar_lea.vmem [#allocation6], %s1305
          %1307 = dma.done %s1303, 256
        $region104: #{tpu_custom_call.1} parent=95 // pred_fallthru
          _
        // Predicated region
        $region105: #{tpu_custom_call.1} parent=95 // pred_check
          %p1308 = pneg %p415
        $region106: #{tpu_custom_call.1} parent=95 // pred_check_branch
          %1310 = sbr.rel (%p1308) target = $region108
        $region107: #{tpu_custom_call.1} parent=95 // pred_region
          %s1311 = sand.u32 %s36, 1
          %s1312 = scalar_lea.sflag [#allocation7], %s1311
          %s1313 = sand.u32 %s400, 1
          %s1314 = smul.addr %s1313, 2
          %s1315 = scalar_lea.vmem [#allocation8], %s1314
          %1316 = dma.done %s1312, 32
        $region108: #{tpu_custom_call.1} parent=95 // pred_fallthru
          _
      $region96: #{tpu_custom_call.1} parent=5 // pred_fallthru
        _
    $region6: #{tpu_custom_call.1} parent=1 // loop_footer
      %s34 = sadd.s32 1, %s30
    $region7: #{tpu_custom_call.1} parent=1 // loop_footer_branch
      %29 = sbr.rel target = $region3
    $region8: #{tpu_custom_call.1} parent=1 // loop_exit
      _
    %1317 = vsyncpa [#allocation3], 1
    %s1318 = scalar_lea.sflag [#allocation3], 1
    %1319 = vsyncpa %s1318, 1
    %1320 = vsyncpa [#allocation4], 1
    %s1321 = scalar_lea.sflag [#allocation4], 1
    %1322 = vsyncpa %s1321, 1
    %1323 = vsyncpa [#allocation7], 1
    %s1324 = scalar_lea.sflag [#allocation7], 1
    %1325 = vsyncpa %s1324, 1

</llo_original>
